<compile_context>
chip_gen: v5e
topology: v5e:2x2
jax: 0.10.0
libtpu: 0.0.40
codegen_flags: <defaults>
</compile_context>

<pallas_src>
import functools

import jax
import jax.numpy as jnp
from jax import lax
from jax.experimental import pallas as pl
from jax.experimental.pallas import tpu as pltpu

_NEG = -1e30  # finite "-inf" sentinel for masked logits / LSE init (avoids inf-inf NaNs)


def _contrastive_pair_kernel(l2_normalize, n_valid, n_pad, mm_dtype,
                             scale_ref, a_ref, b_ref, loss_ref,
                             m_row_ref, l_row_ref, m_col_ref, l_col_ref,
                             acc_ref, a_cache_ref):
    """Bidirectional cross-entropy (labels = arange) over scale * A @ B.T, tiled."""
    i = pl.program_id(0)
    j = pl.program_id(1)
    ni = pl.num_programs(0)
    nj = pl.num_programs(1)

    tm = a_ref.shape[0]
    tn = b_ref.shape[0]
    njs = l_col_ref.shape[0]                 # static number of column tiles
    need_mask = (n_valid != n_pad)           # static python bool
    eps = 1e-12

    scale = scale_ref[0]

    # ---- first grid step: zero the scalar accumulator & the output ----
    @pl.when(jnp.logical_and(i == 0, j == 0))
    def _():
        acc_ref[...] = jnp.zeros_like(acc_ref)
        loss_ref[...] = jnp.zeros_like(loss_ref)

    # ---- hoisted A-tile prep (normalize + fold scale + cast), once per row tile ----
    @pl.when(j == 0)
    def _():
        if l2_normalize:
            a32 = a_ref[...].astype(jnp.float32)
            # F.normalize(v): v / max(||v||, eps) == v * rsqrt(max(||v||^2, eps^2))
            a32 = a32 * lax.rsqrt(
                jnp.maximum(jnp.sum(a32 * a32, axis=-1, keepdims=True), eps * eps))
            a_cache_ref[...] = (a32 * scale).astype(a_cache_ref.dtype)
        else:
            # No f32 round-trip needed in the unnormalized path.
            a_cache_ref[...] = (a_ref[...].astype(a_cache_ref.dtype)
                                * scale.astype(a_cache_ref.dtype))

    # ---- B-tile prep (changes every inner step) ----
    if l2_normalize:
        b32 = b_ref[...].astype(jnp.float32)
        b32 = b32 * lax.rsqrt(
            jnp.maximum(jnp.sum(b32 * b32, axis=-1, keepdims=True), eps * eps))
        b_mm = b32.astype(mm_dtype)
    else:
        b_mm = b_ref[...] if b_ref.dtype == mm_dtype else b_ref[...].astype(mm_dtype)

    # ---- logits tile: (scale*A) @ B.T, transpose folded into the contraction ----
    s = lax.dot_general(a_cache_ref[...], b_mm, (((1,), (1,)), ((), ())),
                        preferred_element_type=jnp.float32)          # (tm, tn) f32

    # ---- padding masks (only generated when N was padded) ----
    if need_mask:
        row_ids = lax.broadcasted_iota(jnp.int32, (tm, 1), 0) + i * tm
        col_ids = lax.broadcasted_iota(jnp.int32, (1, tn), 1) + j * tn
        valid_row = row_ids < n_valid
        valid_col = col_ids < n_valid
        s_cm = jnp.where(valid_col, s, _NEG)     # padded cols removed from row-LSE
    else:
        valid_row = valid_col = None
        s_cm = s

    # ---- row-wise online LSE (resident across j) ----
    @pl.when(j == 0)
    def _():
        m_row_ref[...] = jnp.full_like(m_row_ref, _NEG)
        l_row_ref[...] = jnp.zeros_like(l_row_ref)

    tile_row_max = jnp.max(s_cm, axis=1, keepdims=True)               # (tm, 1)
    m_old = m_row_ref[...]
    m_new = jnp.maximum(m_old, tile_row_max)
    p = jnp.exp(s_cm - m_new)                                         # single (tm,tn) exp
    l_row_ref[...] = (l_row_ref[...] * jnp.exp(m_old - m_new)
                      + jnp.sum(p, axis=1, keepdims=True))
    m_row_ref[...] = m_new

    # ---- column-wise online LSE (resident across i; one (1, tn) slot per j) ----
    @pl.when(i == 0)
    def _():
        m_col_ref[j] = jnp.full((1, tn), _NEG, jnp.float32)
        l_col_ref[j] = jnp.zeros((1, tn), jnp.float32)

    if need_mask:
        s_rm = jnp.where(valid_row, s, _NEG)     # padded rows removed from col-LSE
    else:
        s_rm = s
    tile_col_max = jnp.max(s_rm, axis=0, keepdims=True)               # (1, tn)
    mc_old = m_col_ref[j]
    mc_new = jnp.maximum(mc_old, tile_col_max)

    if l2_normalize:
        # Rank-1 correction reuses p instead of a second full exp pass:
        #   sum_r exp(s[r,c] - mc[c]) = (sum_r p[r,c] * exp(m_new[r])) * exp(-mc[c]).
        # Safe because l2-normalized logits are bounded by |scale| (assumes scale < ~80,
        # i.e. the usual CLIP regime), so exp(m_new) / exp(-mc_new) stay finite in f32.
        q = p * jnp.exp(m_new)
        if need_mask:
            q = jnp.where(valid_row, q, 0.0)
        col_contrib = jnp.sum(q, axis=0, keepdims=True) * jnp.exp(-mc_new)
    else:
        # Unbounded logits: keep the numerically safe second exp pass.
        col_contrib = jnp.sum(jnp.exp(s_rm - mc_new), axis=0, keepdims=True)

    l_col_ref[j] = l_col_ref[j] * jnp.exp(mc_old - mc_new) + col_contrib
    m_col_ref[j] = mc_new

    # ---- diagonal targets: logits[k, k] pulled out of s on diagonal tiles only ----
    # Column tile j's diagonal block [j*tn, (j+1)*tn) lives entirely inside one row tile
    # because tm % tn == 0.
    @pl.when(jnp.logical_and(j * tn >= i * tm, j * tn < (i + 1) * tm))
    def _():
        row_off = j * tn - i * tm
        rr = lax.broadcasted_iota(jnp.int32, (tm, tn), 0)
        cc = lax.broadcasted_iota(jnp.int32, (tm, tn), 1)
        dmask = rr == cc + row_off
        if need_mask:
            dmask = jnp.logical_and(dmask, valid_col)
        diag_sum = jnp.sum(jnp.where(dmask, s, 0.0), keepdims=True)   # (1, 1)
        acc_ref[...] = acc_ref[...] - 2.0 * diag_sum

    # ---- row tile finished: fold its LSEs into the scalar accumulator ----
    @pl.when(j == nj - 1)
    def _():
        row_lse = jnp.log(l_row_ref[...]) + m_row_ref[...]
        if need_mask:
            row_lse = jnp.where(valid_row, row_lse, 0.0)
        acc_ref[...] = acc_ref[...] + jnp.sum(row_lse, keepdims=True)

    # ---- very last step: add column LSEs and emit the scalar loss ----
    @pl.when(jnp.logical_and(i == ni - 1, j == nj - 1))
    def _():
        col_lse = jnp.log(l_col_ref[...]) + m_col_ref[...]            # (njs, 1, tn)
        if need_mask:
            gcol = (lax.broadcasted_iota(jnp.int32, (njs, 1, tn), 0) * tn
                    + lax.broadcasted_iota(jnp.int32, (njs, 1, tn), 2))
            col_lse = jnp.where(gcol < n_valid, col_lse, 0.0)
        total = acc_ref[...] + jnp.sum(col_lse)
        # loss = 0.5 * (mean(lse_row - diag) + mean(lse_col - diag)), over the n real rows
        loss_ref[...] = total * (1.0 / (2.0 * n_valid))


def _vmem_capacity_bytes():
    try:
        return int(pltpu.get_tpu_info().vmem_capacity_bytes)
    except Exception:  # pragma: no cover - conservative fallback (v7x per-core VMEM)
        return 64 * 1024 * 1024


def _vmem_need_bytes(tm, tn, d, nj, in_itemsize, mm_itemsize):
    a_blocks = 2 * tm * d * in_itemsize        # double-buffered A input block
    b_blocks = 2 * tn * d * in_itemsize        # double-buffered B input block
    a_cache = tm * d * mm_itemsize             # hoisted, normalized/scaled A tile
    logits_tmp = 3 * tm * tn * 4               # s / p / iota-mask temporaries
    row_state = 2 * tm * 512                   # (tm, 1) f32, lane-padded to 128
    col_state = 2 * nj * 8 * tn * 4            # (nj, 1, tn) f32, sublane-padded to 8
    norm_tmp = (tm + tn) * d * 4               # f32 normalization temporaries
    return (a_blocks + b_blocks + a_cache + logits_tmp + row_state + col_state
            + norm_tmp + (64 << 10))


def _select_tiles(n_pad, d, in_itemsize, mm_itemsize, budget):
    # TN: full MXU width on v6e/v7x (256) when possible, 128-aligned otherwise.
    tn = 256 if n_pad % 256 == 0 else 128
    tm = tn
    # TM: largest multiple of TN dividing n_pad that fits the per-generation VMEM budget.
    for cand in (1024, 512, 256, 128):
        if cand < tn or n_pad % cand != 0:
            continue
        if _vmem_need_bytes(cand, tn, d, n_pad // tn, in_itemsize, mm_itemsize) <= budget:
            tm = cand
            break
    return tm, tn


def contrastive_pair_loss(features_a, features_b, logit_scale, l2_normalize,
                          matmul_in_bf16=True):
    """Pallas call: tiled bidirectional contrastive (InfoNCE) pair loss."""
    n, d = features_a.shape
    assert features_b.shape == (n, d), "paired modalities must have matching shapes"

    in_dtype = jnp.dtype(features_a.dtype)
    if matmul_in_bf16 or in_dtype == jnp.dtype(jnp.bfloat16):
        mm_dtype = jnp.dtype(jnp.bfloat16)
    else:
        mm_dtype = jnp.dtype(jnp.float32)
    if mm_dtype == jnp.dtype(jnp.bfloat16) and in_dtype != jnp.dtype(jnp.bfloat16):
        # B is re-streamed ni times from HBM; pre-casting halves that dominant stream.
        features_a = features_a.astype(jnp.bfloat16)
        features_b = features_b.astype(jnp.bfloat16)

    # Pad N up to a multiple of 128; padded rows/cols are masked out inside the kernel
    # so any batch size keeps the tiled, pipelined path.
    n_pad = ((n + 127) // 128) * 128
    if n_pad != n:
        features_a = jnp.pad(features_a, ((0, n_pad - n), (0, 0)))
        features_b = jnp.pad(features_b, ((0, n_pad - n), (0, 0)))

    in_itemsize = jnp.dtype(features_a.dtype).itemsize
    capacity = _vmem_capacity_bytes()
    tile_budget = int(0.55 * capacity)
    tm, tn = _select_tiles(n_pad, d, in_itemsize, mm_dtype.itemsize, tile_budget)
    ni = n_pad // tm
    nj = n_pad // tn

    need = _vmem_need_bytes(tm, tn, d, nj, in_itemsize, mm_dtype.itemsize)
    vmem_limit = int(min(0.92 * capacity, max(48 << 20, 2 * need)))

    kernel = functools.partial(_contrastive_pair_kernel, l2_normalize, n, n_pad, mm_dtype)
    scale = jnp.reshape(jnp.asarray(logit_scale, jnp.float32), (1,))

    out = pl.pallas_call(
        kernel,
        out_shape=jax.ShapeDtypeStruct((1, 1), jnp.float32),
        grid_spec=pltpu.PrefetchScalarGridSpec(
            num_scalar_prefetch=1,                           # logit_scale -> SMEM
            grid=(ni, nj),
            in_specs=[
                pl.BlockSpec((tm, d), lambda i, j, s: (i, 0)),   # A row tile
                pl.BlockSpec((tn, d), lambda i, j, s: (j, 0)),   # B row tile
            ],
            out_specs=pl.BlockSpec((1, 1), lambda i, j, s: (0, 0)),
            scratch_shapes=[
                pltpu.VMEM((tm, 1), jnp.float32),        # m_row
                pltpu.VMEM((tm, 1), jnp.float32),        # l_row
                pltpu.VMEM((nj, 1, tn), jnp.float32),    # m_col (all column tiles)
                pltpu.VMEM((nj, 1, tn), jnp.float32),    # l_col (all column tiles)
                pltpu.VMEM((1, 1), jnp.float32),         # scalar accumulator
                pltpu.VMEM((tm, d), mm_dtype),           # hoisted A tile cache
            ],
        ),
        compiler_params=pltpu.CompilerParams(
            dimension_semantics=("arbitrary", "arbitrary"),
            vmem_limit_bytes=vmem_limit,
        ),
        cost_estimate=pl.CostEstimate(
            flops=2 * n_pad * n_pad * d,
            transcendentals=(1 if l2_normalize else 2) * n_pad * n_pad,
            bytes_accessed=(n_pad * d * in_itemsize              # A read once
                            + ni * n_pad * d * in_itemsize       # B re-streamed ni times
                            + 4),
        ),
    )(scale, features_a, features_b)
    return out[0, 0]


class ContrastiveLoss:
    """JAX/Pallas port of mmlearn ContrastiveLoss (single-device forward)."""

    def __init__(self, l2_normalize=False, local_loss=False, gather_with_grad=False,
                 modality_alignment=False, cache_labels=False, matmul_in_bf16=True):
        self.l2_normalize = l2_normalize
        self.local_loss = local_loss
        self.gather_with_grad = gather_with_grad
        self.modality_alignment = modality_alignment
        self.cache_labels = cache_labels
        self.matmul_in_bf16 = matmul_in_bf16
        # TODO(synk): distributed gather (_gather_dicts / all_gather) has no
        # single-kernel Pallas equivalent here; world_size==1 path only.

    def __call__(self, embeddings, example_ids, logit_scale, modality_loss_pairs):
        losses = []
        for (mod_a, mod_b), weight in modality_loss_pairs:
            if mod_a not in embeddings or mod_b not in embeddings:
                continue
            # find_matching_indices: example ids are identical in this setup,
            # so matching indices are the identity permutation.
            loss = contrastive_pair_loss(embeddings[mod_a], embeddings[mod_b],
                                         logit_scale, self.l2_normalize,
                                         matmul_in_bf16=self.matmul_in_bf16)
            losses.append(loss * weight)
        # TODO(synk): modality_alignment loss (BCE over concatenated features)
        # not implemented; default modality_alignment=False path only.
        if not losses:
            return jnp.zeros((), dtype=next(iter(embeddings.values())).dtype)
        return jnp.sum(jnp.stack(losses))


def _reference_pair_loss(a, b, scale, l2_normalize):
    """Pure-JAX reference for validation."""
    a = a.astype(jnp.float32)
    b = b.astype(jnp.float32)
    if l2_normalize:
        a = a / jnp.maximum(jnp.linalg.norm(a, axis=-1, keepdims=True), 1e-12)
        b = b / jnp.maximum(jnp.linalg.norm(b, axis=-1, keepdims=True), 1e-12)
    logits = scale * (a @ b.T)
    labels = jnp.arange(logits.shape[0])

    def ce(lg):
        return jnp.mean(jax.nn.logsumexp(lg, axis=-1) - lg[labels, labels])

    return (ce(logits) + ce(logits.T)) * 0.5


if __name__ == "__main__":
    key = jax.random.PRNGKey(0)
    k1, k2, k3, k4, k5, k6, k7, k8 = jax.random.split(key, 8)

    logit_scale = jnp.asarray(1.0 / 0.07, dtype=jnp.float32)  # exp of learned log-scale

    # --- 1) module-level check: batch of 8 paired examples, 32-dim embeddings ---
    N, D = 8, 32
    embeddings = {
        "text": jax.random.normal(k1, (N, D), dtype=jnp.float32),
        "rgb": jax.random.normal(k2, (N, D), dtype=jnp.float32),
    }
    ids = jnp.stack([jnp.zeros((N,), jnp.int32), jnp.arange(N, dtype=jnp.int32)], axis=1)
    example_ids = {"text": ids, "rgb": ids}
    modality_loss_pairs = [(("text", "rgb"), 1.0)]

    loss_fn = ContrastiveLoss(l2_normalize=True)
    loss = jax.block_until_ready(
        loss_fn(embeddings, example_ids, logit_scale, modality_loss_pairs))
    ref = _reference_pair_loss(embeddings["text"], embeddings["rgb"], logit_scale, True)
    assert jnp.allclose(loss, ref, atol=5e-2, rtol=2e-2), (loss, ref)

    # --- 2) asymmetric tiles + multi-row-tile path: N=1536 -> TM=512, TN=256, (3,6) grid ---
    N2, D2 = 1536, 64
    a2 = jax.random.normal(k3, (N2, D2), dtype=jnp.float32)
    b2 = jax.random.normal(k4, (N2, D2), dtype=jnp.float32)
    loss2 = jax.block_until_ready(contrastive_pair_loss(a2, b2, logit_scale, True))
    ref2 = _reference_pair_loss(a2, b2, logit_scale, True)
    assert jnp.allclose(loss2, ref2, atol=5e-2, rtol=2e-2), (loss2, ref2)

    # --- 3) padding/masking path: N=200 (not a multiple of 128) ---
    N3, D3 = 200, 64
    a3 = jax.random.normal(k5, (N3, D3), dtype=jnp.float32)
    b3 = jax.random.normal(k6, (N3, D3), dtype=jnp.float32)
    loss3 = jax.block_until_ready(contrastive_pair_loss(a3, b3, logit_scale, True))
    ref3 = _reference_pair_loss(a3, b3, logit_scale, True)
    assert jnp.allclose(loss3, ref3, atol=5e-2, rtol=2e-2), (loss3, ref3)

    # --- 4) f32 MXU + two-pass-exp path (l2_normalize=False), multi-i grid (3,3) ---
    N4, D4 = 384, 32
    a4 = jax.random.normal(k7, (N4, D4), dtype=jnp.float32)
    b4 = jax.random.normal(k8, (N4, D4), dtype=jnp.float32)
    scale4 = jnp.asarray(1.0, dtype=jnp.float32)
    loss4 = jax.block_until_ready(
        contrastive_pair_loss(a4, b4, scale4, False, matmul_in_bf16=False))
    ref4 = _reference_pair_loss(a4, b4, scale4, False)
    assert jnp.allclose(loss4, ref4, atol=5e-3, rtol=1e-3), (loss4, ref4)

    print("KERNEL_OK")
</pallas_src>

<mosaic_0001>
module attributes {stable_mosaic.version = 11 : i64} {
  func.func @_contrastive_pair_kernel(%arg0: i32, %arg1: i32, %arg2: memref<1xf32, #tpu.memory_space<smem>>, %arg3: memref<128x32xbf16, #tpu.memory_space<vmem>>, %arg4: memref<128x32xbf16, #tpu.memory_space<vmem>>, %arg5: memref<1x1xf32, #tpu.memory_space<vmem>>, %arg6: memref<128x1xf32, #tpu.memory_space<vmem>>, %arg7: memref<128x1xf32, #tpu.memory_space<vmem>>, %arg8: memref<1x1x128xf32, #tpu.memory_space<vmem>>, %arg9: memref<1x1x128xf32, #tpu.memory_space<vmem>>, %arg10: memref<1x1xf32, #tpu.memory_space<vmem>>, %arg11: memref<128x32xbf16, #tpu.memory_space<vmem>>) attributes {dimension_semantics = [#tpu.dimension_semantics<arbitrary>, #tpu.dimension_semantics<arbitrary>], iteration_bounds = array<i64: 1, 1>, scalar_prefetch = 1 : i64, scratch_operands = 6 : i64, tpu.core_type = #tpu.core_type<tc>, window_params = [{transform_indices = @transform_0, window_bounds = array<i64: 128, 32>}, {transform_indices = @transform_1, window_bounds = array<i64: 128, 32>}, {pipeline_mode = #tpu.pipeline_mode<synchronous>, transform_indices = @transform_2, window_bounds = array<i64: 1, 1>}]} {
    %c0 = arith.constant 0 : index
    %0 = memref.load %arg2[%c0] : memref<1xf32, #tpu.memory_space<smem>>
    %c0_i32 = arith.constant 0 : i32
    %1 = arith.cmpi eq, %arg0, %c0_i32 : i32
    %c0_i32_0 = arith.constant 0 : i32
    %2 = arith.cmpi eq, %arg1, %c0_i32_0 : i32
    %3 = arith.andi %1, %2 : i1
    %4 = arith.extui %3 : i1 to i32
    %c0_i32_1 = arith.constant 0 : i32
    %5 = arith.cmpi ne, %4, %c0_i32_1 : i32
    scf.if %5 {
      %cst_50 = arith.constant 0.000000e+00 : f32
      %116 = vector.broadcast %cst_50 : f32 to vector<1x1xf32>
      %c0_51 = arith.constant 0 : index
      %c0_52 = arith.constant 0 : index
      %117 = vector.load %arg10[%c0_51, %c0_52] : memref<1x1xf32, #tpu.memory_space<vmem>>, vector<1x1xf32>
      tpu.vector_store %arg10[%c0_51, %c0_52], %116 {strides = array<i32>} : memref<1x1xf32, #tpu.memory_space<vmem>>, vector<1x1xf32>,
      %cst_53 = arith.constant 0.000000e+00 : f32
      %118 = vector.broadcast %cst_53 : f32 to vector<1x1xf32>
      %c0_54 = arith.constant 0 : index
      %c0_55 = arith.constant 0 : index
      %119 = vector.load %arg5[%c0_54, %c0_55] : memref<1x1xf32, #tpu.memory_space<vmem>>, vector<1x1xf32>
      tpu.vector_store %arg5[%c0_54, %c0_55], %118 {strides = array<i32>} : memref<1x1xf32, #tpu.memory_space<vmem>>, vector<1x1xf32>,
    } else {
    }
    %c0_i32_2 = arith.constant 0 : i32
    %6 = arith.cmpi eq, %arg1, %c0_i32_2 : i32
    %7 = arith.extui %6 : i1 to i32
    %c0_i32_3 = arith.constant 0 : i32
    %8 = arith.cmpi ne, %7, %c0_i32_3 : i32
    scf.if %8 {
      %c0_50 = arith.constant 0 : index
      %c0_51 = arith.constant 0 : index
      %116 = vector.load %arg3[%c0_50, %c0_51] : memref<128x32xbf16, #tpu.memory_space<vmem>>, vector<128x32xbf16>
      %117 = arith.extf %116 : vector<128x32xbf16> to vector<128x32xf32>
      %118 = arith.mulf %117, %117 : vector<128x32xf32>
      %cst_52 = arith.constant dense<0.000000e+00> : vector<128xf32>
      %119 = vector.multi_reduction <add>, %118, %cst_52 [1] : vector<128x32xf32> to vector<128xf32>
      %120 = vector.shape_cast %119 : vector<128xf32> to vector<128x1xf32>
      %cst_53 = arith.constant 1.000000e-24 : f32
      %121 = vector.broadcast %cst_53 : f32 to vector<128x1xf32>
      %122 = arith.maximumf %120, %121 : vector<128x1xf32>
      %123 = math.rsqrt %122 : vector<128x1xf32>
      %124 = vector.broadcast %123 : vector<128x1xf32> to vector<128x32xf32>
      %125 = arith.mulf %117, %124 : vector<128x32xf32>
      %126 = vector.broadcast %0 : f32 to vector<128x32xf32>
      %127 = arith.mulf %125, %126 : vector<128x32xf32>
      %128 = arith.truncf %127 : vector<128x32xf32> to vector<128x32xbf16>
      %c0_54 = arith.constant 0 : index
      %c0_55 = arith.constant 0 : index
      %129 = vector.load %arg11[%c0_54, %c0_55] : memref<128x32xbf16, #tpu.memory_space<vmem>>, vector<128x32xbf16>
      tpu.vector_store %arg11[%c0_54, %c0_55], %128 {strides = array<i32>} : memref<128x32xbf16, #tpu.memory_space<vmem>>, vector<128x32xbf16>,
    } else {
    }
    %c0_4 = arith.constant 0 : index
    %c0_5 = arith.constant 0 : index
    %9 = vector.load %arg4[%c0_4, %c0_5] : memref<128x32xbf16, #tpu.memory_space<vmem>>, vector<128x32xbf16>
    %10 = arith.extf %9 : vector<128x32xbf16> to vector<128x32xf32>
    %11 = arith.mulf %10, %10 : vector<128x32xf32>
    %cst = arith.constant dense<0.000000e+00> : vector<128xf32>
    %12 = vector.multi_reduction <add>, %11, %cst [1] : vector<128x32xf32> to vector<128xf32>
    %13 = vector.shape_cast %12 : vector<128xf32> to vector<128x1xf32>
    %cst_6 = arith.constant 1.000000e-24 : f32
    %14 = vector.broadcast %cst_6 : f32 to vector<128x1xf32>
    %15 = arith.maximumf %13, %14 : vector<128x1xf32>
    %16 = math.rsqrt %15 : vector<128x1xf32>
    %17 = vector.broadcast %16 : vector<128x1xf32> to vector<128x32xf32>
    %18 = arith.mulf %10, %17 : vector<128x32xf32>
    %19 = arith.truncf %18 : vector<128x32xf32> to vector<128x32xbf16>
    %c0_7 = arith.constant 0 : index
    %c0_8 = arith.constant 0 : index
    %20 = vector.load %arg11[%c0_7, %c0_8] : memref<128x32xbf16, #tpu.memory_space<vmem>>, vector<128x32xbf16>
    %cst_9 = arith.constant dense<0.000000e+00> : vector<128x128xf32>
    %21 = tpu.matmul %20, %19, %cst_9 {dimension_numbers = #tpu.dot_dimension_numbers<[1], [1], [0], [0], [0, 0, 1, 0], [], []>} : vector<128x32xbf16>, vector<128x32xbf16>, vector<128x128xf32> -> vector<128x128xf32>
    %22 = tpu.iota {dimensions = array<i32: 0>} : vector<128x1xi32>
    %c128_i32 = arith.constant 128 : i32
    %23 = arith.muli %arg0, %c128_i32 : i32
    %24 = vector.broadcast %23 : i32 to vector<128x1xi32>
    %25 = arith.addi %22, %24 : vector<128x1xi32>
    %26 = tpu.iota {dimensions = array<i32: 1>} : vector<1x128xi32>
    %c128_i32_10 = arith.constant 128 : i32
    %27 = arith.muli %arg1, %c128_i32_10 : i32
    %28 = vector.broadcast %27 : i32 to vector<1x128xi32>
    %29 = arith.addi %26, %28 : vector<1x128xi32>
    %c8_i32 = arith.constant 8 : i32
    %30 = vector.broadcast %c8_i32 : i32 to vector<128x1xi32>
    %31 = arith.cmpi slt, %25, %30 : vector<128x1xi32>
    %c8_i32_11 = arith.constant 8 : i32
    %32 = vector.broadcast %c8_i32_11 : i32 to vector<1x128xi32>
    %33 = arith.cmpi slt, %29, %32 : vector<1x128xi32>
    %cst_12 = arith.constant -1.000000e+30 : f32
    %34 = vector.shape_cast %33 : vector<1x128xi1> to vector<1x128xi1>
    %35 = vector.broadcast %34 : vector<1x128xi1> to vector<128x128xi1>
    %36 = vector.broadcast %cst_12 : f32 to vector<128x128xf32>
    %37 = arith.select %35, %21, %36 : vector<128x128xi1>, vector<128x128xf32>
    %c0_i32_13 = arith.constant 0 : i32
    %38 = arith.cmpi eq, %arg1, %c0_i32_13 : i32
    %39 = arith.extui %38 : i1 to i32
    %c0_i32_14 = arith.constant 0 : i32
    %40 = arith.cmpi ne, %39, %c0_i32_14 : i32
    scf.if %40 {
      %cst_50 = arith.constant -1.000000e+30 : f32
      %116 = vector.broadcast %cst_50 : f32 to vector<128x1xf32>
      %c0_51 = arith.constant 0 : index
      %c0_52 = arith.constant 0 : index
      %117 = vector.load %arg6[%c0_51, %c0_52] : memref<128x1xf32, #tpu.memory_space<vmem>>, vector<128x1xf32>
      tpu.vector_store %arg6[%c0_51, %c0_52], %116 {strides = array<i32>} : memref<128x1xf32, #tpu.memory_space<vmem>>, vector<128x1xf32>,
      %cst_53 = arith.constant 0.000000e+00 : f32
      %118 = vector.broadcast %cst_53 : f32 to vector<128x1xf32>
      %c0_54 = arith.constant 0 : index
      %c0_55 = arith.constant 0 : index
      %119 = vector.load %arg7[%c0_54, %c0_55] : memref<128x1xf32, #tpu.memory_space<vmem>>, vector<128x1xf32>
      tpu.vector_store %arg7[%c0_54, %c0_55], %118 {strides = array<i32>} : memref<128x1xf32, #tpu.memory_space<vmem>>, vector<128x1xf32>,
    } else {
    }
    %cst_15 = arith.constant dense<0xFF800000> : vector<128xf32>
    %41 = vector.multi_reduction <maximumf>, %37, %cst_15 [1] : vector<128x128xf32> to vector<128xf32>
    %42 = vector.shape_cast %41 : vector<128xf32> to vector<128x1xf32>
    %c0_16 = arith.constant 0 : index
    %c0_17 = arith.constant 0 : index
    %43 = vector.load %arg6[%c0_16, %c0_17] : memref<128x1xf32, #tpu.memory_space<vmem>>, vector<128x1xf32>
    %44 = arith.maximumf %43, %42 : vector<128x1xf32>
    %45 = vector.broadcast %44 : vector<128x1xf32> to vector<128x128xf32>
    %46 = arith.subf %37, %45 : vector<128x128xf32>
    %47 = math.exp %46 : vector<128x128xf32>
    %c0_18 = arith.constant 0 : index
    %c0_19 = arith.constant 0 : index
    %48 = vector.load %arg7[%c0_18, %c0_19] : memref<128x1xf32, #tpu.memory_space<vmem>>, vector<128x1xf32>
    %49 = arith.subf %43, %44 : vector<128x1xf32>
    %50 = math.exp %49 : vector<128x1xf32>
    %51 = arith.mulf %48, %50 : vector<128x1xf32>
    %cst_20 = arith.constant dense<0.000000e+00> : vector<128xf32>
    %52 = vector.multi_reduction <add>, %47, %cst_20 [1] : vector<128x128xf32> to vector<128xf32>
    %53 = vector.shape_cast %52 : vector<128xf32> to vector<128x1xf32>
    %54 = arith.addf %51, %53 : vector<128x1xf32>
    %c0_21 = arith.constant 0 : index
    %c0_22 = arith.constant 0 : index
    %55 = vector.load %arg7[%c0_21, %c0_22] : memref<128x1xf32, #tpu.memory_space<vmem>>, vector<128x1xf32>
    tpu.vector_store %arg7[%c0_21, %c0_22], %54 {strides = array<i32>} : memref<128x1xf32, #tpu.memory_space<vmem>>, vector<128x1xf32>,
    %c0_23 = arith.constant 0 : index
    %c0_24 = arith.constant 0 : index
    %56 = vector.load %arg6[%c0_23, %c0_24] : memref<128x1xf32, #tpu.memory_space<vmem>>, vector<128x1xf32>
    tpu.vector_store %arg6[%c0_23, %c0_24], %44 {strides = array<i32>} : memref<128x1xf32, #tpu.memory_space<vmem>>, vector<128x1xf32>,
    %c0_i32_25 = arith.constant 0 : i32
    %57 = arith.cmpi eq, %arg0, %c0_i32_25 : i32
    %58 = arith.extui %57 : i1 to i32
    %c0_i32_26 = arith.constant 0 : i32
    %59 = arith.cmpi ne, %58, %c0_i32_26 : i32
    scf.if %59 {
      %cst_50 = arith.constant -1.000000e+30 : f32
      %116 = vector.broadcast %cst_50 : f32 to vector<1x128xf32>
      %117 = arith.index_cast %arg1 : i32 to index
      %c0_51 = arith.constant 0 : index
      %c0_52 = arith.constant 0 : index
      %118 = vector.load %arg8[%117, %c0_51, %c0_52] : memref<1x1x128xf32, #tpu.memory_space<vmem>>, vector<1x1x128xf32>
      %119 = vector.shape_cast %118 : vector<1x1x128xf32> to vector<1x128xf32>
      %120 = vector.shape_cast %116 : vector<1x128xf32> to vector<1x1x128xf32>
      tpu.vector_store %arg8[%117, %c0_51, %c0_52], %120 {strides = array<i32>} : memref<1x1x128xf32, #tpu.memory_space<vmem>>, vector<1x1x128xf32>,
      %cst_53 = arith.constant 0.000000e+00 : f32
      %121 = vector.broadcast %cst_53 : f32 to vector<1x128xf32>
      %122 = arith.index_cast %arg1 : i32 to index
      %c0_54 = arith.constant 0 : index
      %c0_55 = arith.constant 0 : index
      %123 = vector.load %arg9[%122, %c0_54, %c0_55] : memref<1x1x128xf32, #tpu.memory_space<vmem>>, vector<1x1x128xf32>
      %124 = vector.shape_cast %123 : vector<1x1x128xf32> to vector<1x128xf32>
      %125 = vector.shape_cast %121 : vector<1x128xf32> to vector<1x1x128xf32>
      tpu.vector_store %arg9[%122, %c0_54, %c0_55], %125 {strides = array<i32>} : memref<1x1x128xf32, #tpu.memory_space<vmem>>, vector<1x1x128xf32>,
    } else {
    }
    %cst_27 = arith.constant -1.000000e+30 : f32
    %60 = vector.shape_cast %31 : vector<128x1xi1> to vector<128x1xi1>
    %61 = vector.broadcast %60 : vector<128x1xi1> to vector<128x128xi1>
    %62 = vector.broadcast %cst_27 : f32 to vector<128x128xf32>
    %63 = arith.select %61, %21, %62 : vector<128x128xi1>, vector<128x128xf32>
    %cst_28 = arith.constant dense<0xFF800000> : vector<128xf32>
    %64 = vector.multi_reduction <maximumf>, %63, %cst_28 [0] : vector<128x128xf32> to vector<128xf32>
    %65 = vector.shape_cast %64 : vector<128xf32> to vector<1x128xf32>
    %66 = arith.index_cast %arg1 : i32 to index
    %c0_29 = arith.constant 0 : index
    %c0_30 = arith.constant 0 : index
    %67 = vector.load %arg8[%66, %c0_29, %c0_30] : memref<1x1x128xf32, #tpu.memory_space<vmem>>, vector<1x1x128xf32>
    %68 = vector.shape_cast %67 : vector<1x1x128xf32> to vector<1x128xf32>
    %69 = arith.maximumf %68, %65 : vector<1x128xf32>
    %70 = math.exp %44 : vector<128x1xf32>
    %71 = vector.broadcast %70 : vector<128x1xf32> to vector<128x128xf32>
    %72 = arith.mulf %47, %71 : vector<128x128xf32>
    %cst_31 = arith.constant 0.000000e+00 : f32
    %73 = vector.shape_cast %31 : vector<128x1xi1> to vector<128x1xi1>
    %74 = vector.broadcast %73 : vector<128x1xi1> to vector<128x128xi1>
    %75 = vector.broadcast %cst_31 : f32 to vector<128x128xf32>
    %76 = arith.select %74, %72, %75 : vector<128x128xi1>, vector<128x128xf32>
    %cst_32 = arith.constant dense<0.000000e+00> : vector<128xf32>
    %77 = vector.multi_reduction <add>, %76, %cst_32 [0] : vector<128x128xf32> to vector<128xf32>
    %78 = vector.shape_cast %77 : vector<128xf32> to vector<1x128xf32>
    %cst_33 = arith.constant 0.000000e+00 : f32
    %79 = vector.broadcast %cst_33 : f32 to vector<1x128xf32>
    %80 = arith.subf %79, %69 : vector<1x128xf32>
    %81 = math.exp %80 : vector<1x128xf32>
    %82 = arith.mulf %78, %81 : vector<1x128xf32>
    %83 = arith.index_cast %arg1 : i32 to index
    %c0_34 = arith.constant 0 : index
    %c0_35 = arith.constant 0 : index
    %84 = vector.load %arg9[%83, %c0_34, %c0_35] : memref<1x1x128xf32, #tpu.memory_space<vmem>>, vector<1x1x128xf32>
    %85 = vector.shape_cast %84 : vector<1x1x128xf32> to vector<1x128xf32>
    %86 = arith.subf %68, %69 : vector<1x128xf32>
    %87 = math.exp %86 : vector<1x128xf32>
    %88 = arith.mulf %85, %87 : vector<1x128xf32>
    %89 = arith.addf %88, %82 : vector<1x128xf32>
    %90 = arith.index_cast %arg1 : i32 to index
    %c0_36 = arith.constant 0 : index
    %c0_37 = arith.constant 0 : index
    %91 = vector.load %arg9[%90, %c0_36, %c0_37] : memref<1x1x128xf32, #tpu.memory_space<vmem>>, vector<1x1x128xf32>
    %92 = vector.shape_cast %91 : vector<1x1x128xf32> to vector<1x128xf32>
    %93 = vector.shape_cast %89 : vector<1x128xf32> to vector<1x1x128xf32>
    tpu.vector_store %arg9[%90, %c0_36, %c0_37], %93 {strides = array<i32>} : memref<1x1x128xf32, #tpu.memory_space<vmem>>, vector<1x1x128xf32>,
    %94 = arith.index_cast %arg1 : i32 to index
    %c0_38 = arith.constant 0 : index
    %c0_39 = arith.constant 0 : index
    %95 = vector.load %arg8[%94, %c0_38, %c0_39] : memref<1x1x128xf32, #tpu.memory_space<vmem>>, vector<1x1x128xf32>
    %96 = vector.shape_cast %95 : vector<1x1x128xf32> to vector<1x128xf32>
    %97 = vector.shape_cast %69 : vector<1x128xf32> to vector<1x1x128xf32>
    tpu.vector_store %arg8[%94, %c0_38, %c0_39], %97 {strides = array<i32>} : memref<1x1x128xf32, #tpu.memory_space<vmem>>, vector<1x1x128xf32>,
    %c128_i32_40 = arith.constant 128 : i32
    %98 = arith.muli %arg1, %c128_i32_40 : i32
    %c128_i32_41 = arith.constant 128 : i32
    %99 = arith.muli %arg0, %c128_i32_41 : i32
    %100 = arith.cmpi sge, %98, %99 : i32
    %c128_i32_42 = arith.constant 128 : i32
    %101 = arith.muli %arg1, %c128_i32_42 : i32
    %c1_i32 = arith.constant 1 : i32
    %102 = arith.addi %arg0, %c1_i32 : i32
    %c128_i32_43 = arith.constant 128 : i32
    %103 = arith.muli %102, %c128_i32_43 : i32
    %104 = arith.cmpi slt, %101, %103 : i32
    %105 = arith.andi %100, %104 : i1
    %106 = arith.extui %105 : i1 to i32
    %c0_i32_44 = arith.constant 0 : i32
    %107 = arith.cmpi ne, %106, %c0_i32_44 : i32
    scf.if %107 {
      %c128_i32_50 = arith.constant 128 : i32
      %116 = arith.muli %arg1, %c128_i32_50 : i32
      %c128_i32_51 = arith.constant 128 : i32
      %117 = arith.muli %arg0, %c128_i32_51 : i32
      %118 = arith.subi %116, %117 : i32
      %119 = tpu.iota {dimensions = array<i32: 0>} : vector<128x128xi32>
      %120 = tpu.iota {dimensions = array<i32: 1>} : vector<128x128xi32>
      %121 = vector.broadcast %118 : i32 to vector<128x128xi32>
      %122 = arith.addi %120, %121 : vector<128x128xi32>
      %123 = arith.cmpi eq, %119, %122 : vector<128x128xi32>
      %124 = vector.broadcast %33 : vector<1x128xi1> to vector<128x128xi1>
      %125 = arith.andi %123, %124 : vector<128x128xi1>
      %cst_52 = arith.constant 0.000000e+00 : f32
      %126 = vector.broadcast %cst_52 : f32 to vector<128x128xf32>
      %127 = arith.select %125, %21, %126 : vector<128x128xi1>, vector<128x128xf32>
      %128 = vector.shape_cast %127 : vector<128x128xf32> to vector<1x128x128xf32>
      %cst_53 = arith.constant dense<0.000000e+00> : vector<1xf32>
      %129 = vector.multi_reduction <add>, %128, %cst_53 [1, 2] : vector<1x128x128xf32> to vector<1xf32>
      %130 = vector.shape_cast %129 : vector<1xf32> to vector<1x1x1xf32>
      %131 = vector.extract %130[0, 0, 0] : f32 from vector<1x1x1xf32>
      %132 = vector.broadcast %131 : f32 to vector<1x1xf32>
      %c0_54 = arith.constant 0 : index
      %c0_55 = arith.constant 0 : index
      %133 = vector.load %arg10[%c0_54, %c0_55] : memref<1x1xf32, #tpu.memory_space<vmem>>, vector<1x1xf32>
      %cst_56 = arith.constant 2.000000e+00 : f32
      %134 = vector.broadcast %cst_56 : f32 to vector<1x1xf32>
      %135 = arith.mulf %134, %132 : vector<1x1xf32>
      %136 = arith.subf %133, %135 : vector<1x1xf32>
      %c0_57 = arith.constant 0 : index
      %c0_58 = arith.constant 0 : index
      %137 = vector.load %arg10[%c0_57, %c0_58] : memref<1x1xf32, #tpu.memory_space<vmem>>, vector<1x1xf32>
      tpu.vector_store %arg10[%c0_57, %c0_58], %136 {strides = array<i32>} : memref<1x1xf32, #tpu.memory_space<vmem>>, vector<1x1xf32>,
    } else {
    }
    %c0_i32_45 = arith.constant 0 : i32
    %108 = arith.cmpi eq, %arg1, %c0_i32_45 : i32
    %109 = arith.extui %108 : i1 to i32
    %c0_i32_46 = arith.constant 0 : i32
    %110 = arith.cmpi ne, %109, %c0_i32_46 : i32
    scf.if %110 {
      %c0_50 = arith.constant 0 : index
      %c0_51 = arith.constant 0 : index
      %116 = vector.load %arg7[%c0_50, %c0_51] : memref<128x1xf32, #tpu.memory_space<vmem>>, vector<128x1xf32>
      %117 = math.log %116 : vector<128x1xf32>
      %c0_52 = arith.constant 0 : index
      %c0_53 = arith.constant 0 : index
      %118 = vector.load %arg6[%c0_52, %c0_53] : memref<128x1xf32, #tpu.memory_space<vmem>>, vector<128x1xf32>
      %119 = arith.addf %117, %118 : vector<128x1xf32>
      %cst_54 = arith.constant 0.000000e+00 : f32
      %120 = vector.broadcast %cst_54 : f32 to vector<128x1xf32>
      %121 = arith.select %31, %119, %120 : vector<128x1xi1>, vector<128x1xf32>
      %c0_55 = arith.constant 0 : index
      %c0_56 = arith.constant 0 : index
      %122 = vector.load %arg10[%c0_55, %c0_56] : memref<1x1xf32, #tpu.memory_space<vmem>>, vector<1x1xf32>
      %123 = vector.shape_cast %121 : vector<128x1xf32> to vector<1x128x1xf32>
      %cst_57 = arith.constant dense<0.000000e+00> : vector<1xf32>
      %124 = vector.multi_reduction <add>, %123, %cst_57 [1, 2] : vector<1x128x1xf32> to vector<1xf32>
      %125 = vector.shape_cast %124 : vector<1xf32> to vector<1x1x1xf32>
      %126 = vector.extract %125[0, 0, 0] : f32 from vector<1x1x1xf32>
      %127 = vector.broadcast %126 : f32 to vector<1x1xf32>
      %128 = arith.addf %122, %127 : vector<1x1xf32>
      %c0_58 = arith.constant 0 : index
      %c0_59 = arith.constant 0 : index
      %129 = vector.load %arg10[%c0_58, %c0_59] : memref<1x1xf32, #tpu.memory_space<vmem>>, vector<1x1xf32>
      tpu.vector_store %arg10[%c0_58, %c0_59], %128 {strides = array<i32>} : memref<1x1xf32, #tpu.memory_space<vmem>>, vector<1x1xf32>,
    } else {
    }
    %c0_i32_47 = arith.constant 0 : i32
    %111 = arith.cmpi eq, %arg0, %c0_i32_47 : i32
    %c0_i32_48 = arith.constant 0 : i32
    %112 = arith.cmpi eq, %arg1, %c0_i32_48 : i32
    %113 = arith.andi %111, %112 : i1
    %114 = arith.extui %113 : i1 to i32
    %c0_i32_49 = arith.constant 0 : i32
    %115 = arith.cmpi ne, %114, %c0_i32_49 : i32
    scf.if %115 {
      %c0_50 = arith.constant 0 : index
      %c0_51 = arith.constant 0 : index
      %c0_52 = arith.constant 0 : index
      %116 = vector.load %arg9[%c0_50, %c0_51, %c0_52] : memref<1x1x128xf32, #tpu.memory_space<vmem>>, vector<1x1x128xf32>
      %117 = math.log %116 : vector<1x1x128xf32>
      %c0_53 = arith.constant 0 : index
      %c0_54 = arith.constant 0 : index
      %c0_55 = arith.constant 0 : index
      %118 = vector.load %arg8[%c0_53, %c0_54, %c0_55] : memref<1x1x128xf32, #tpu.memory_space<vmem>>, vector<1x1x128xf32>
      %119 = arith.addf %117, %118 : vector<1x1x128xf32>
      %120 = tpu.iota {dimensions = array<i32: 0>} : vector<1x1x128xi32>
      %c128_i32_56 = arith.constant 128 : i32
      %121 = vector.broadcast %c128_i32_56 : i32 to vector<1x1x128xi32>
      %122 = arith.muli %120, %121 : vector<1x1x128xi32>
      %123 = tpu.iota {dimensions = array<i32: 2>} : vector<1x1x128xi32>
      %124 = arith.addi %122, %123 : vector<1x1x128xi32>
      %c8_i32_57 = arith.constant 8 : i32
      %125 = vector.broadcast %c8_i32_57 : i32 to vector<1x1x128xi32>
      %126 = arith.cmpi slt, %124, %125 : vector<1x1x128xi32>
      %cst_58 = arith.constant 0.000000e+00 : f32
      %127 = vector.broadcast %cst_58 : f32 to vector<1x1x128xf32>
      %128 = arith.select %126, %119, %127 : vector<1x1x128xi1>, vector<1x1x128xf32>
      %c0_59 = arith.constant 0 : index
      %c0_60 = arith.constant 0 : index
      %129 = vector.load %arg10[%c0_59, %c0_60] : memref<1x1xf32, #tpu.memory_space<vmem>>, vector<1x1xf32>
      %130 = vector.shape_cast %128 : vector<1x1x128xf32> to vector<1x1x1x128xf32>
      %cst_61 = arith.constant dense<0.000000e+00> : vector<1xf32>
      %131 = vector.multi_reduction <add>, %130, %cst_61 [1, 2, 3] : vector<1x1x1x128xf32> to vector<1xf32>
      %132 = vector.shape_cast %131 : vector<1xf32> to vector<1x1x1x1xf32>
      %133 = vector.extract %132[0, 0, 0, 0] : f32 from vector<1x1x1x1xf32>
      %134 = vector.broadcast %133 : f32 to vector<1x1xf32>
      %135 = arith.addf %129, %134 : vector<1x1xf32>
      %cst_62 = arith.constant 6.250000e-02 : f32
      %136 = vector.broadcast %cst_62 : f32 to vector<1x1xf32>
      %137 = arith.mulf %135, %136 : vector<1x1xf32>
      %c0_63 = arith.constant 0 : index
      %c0_64 = arith.constant 0 : index
      %138 = vector.load %arg5[%c0_63, %c0_64] : memref<1x1xf32, #tpu.memory_space<vmem>>, vector<1x1xf32>
      tpu.vector_store %arg5[%c0_63, %c0_64], %137 {strides = array<i32>} : memref<1x1xf32, #tpu.memory_space<vmem>>, vector<1x1xf32>,
    } else {
    }
    return
  }
  func.func @transform_0(%arg0: i32, %arg1: i32, %arg2: memref<1xf32, #tpu.memory_space<smem>>) -> (i32, i32) {
    %c0_i32 = arith.constant 0 : i32
    %c0_i32_0 = arith.constant 0 : i32
    return %arg0, %c0_i32 : i32, i32
  }
  func.func @transform_1(%arg0: i32, %arg1: i32, %arg2: memref<1xf32, #tpu.memory_space<smem>>) -> (i32, i32) {
    %c0_i32 = arith.constant 0 : i32
    %c0_i32_0 = arith.constant 0 : i32
    return %arg1, %c0_i32 : i32, i32
  }
  func.func @transform_2(%arg0: i32, %arg1: i32, %arg2: memref<1xf32, #tpu.memory_space<smem>>) -> (i32, i32) {
    %c0_i32 = arith.constant 0 : i32
    %c0_i32_0 = arith.constant 0 : i32
    %c0_i32_1 = arith.constant 0 : i32
    return %c0_i32, %c0_i32_0 : i32, i32
  }
}

</mosaic_0001>

<llo_original>
// kernel: tpu_custom_call.1
$region0: #{tpu_custom_call.1}
  #allocation0 [shape = 'u32[]', space=smem, size = 0x4, offset = 0x4, fixed_abs, tag = 'smem constant byte address 0x4 - core index']
  #allocation1 [shape = 'u32[72,128]{1,0:T(1,128)}', space=vmem, size = 0x9000, scoped, tag = 'internal scratch']
  #allocation2 [shape = 'f32[128,1]{1,0:T(8,128)}', space=vmem, size = 0x10000, scoped, tag = 'scratch operand']
  #allocation3 [shape = 'f32[128,1]{1,0:T(8,128)}', space=vmem, size = 0x10000, scoped, tag = 'scratch operand']
  #allocation4 [shape = 'f32[1,1,128]{2,1,0:T(1,128)}', space=vmem, size = 0x200, scoped, tag = 'scratch operand']
  #allocation5 [shape = 'f32[1,1,128]{2,1,0:T(1,128)}', space=vmem, size = 0x200, scoped, tag = 'scratch operand']
  #allocation6 [shape = 'f32[1,1]{1,0:T(1,128)}', space=vmem, size = 0x200, scoped, tag = 'scratch operand']
  #allocation7 [shape = 'bf16[128,32]{1,0:T(8,128)(2,1)}', space=vmem, size = 0x8000, scoped, tag = 'scratch operand']
  #allocation8 [shape = 's32[1]{0}', space=sflag, size = 0x4, scoped, tag = 'scoped memory for tpu_custom_call.1']
  #allocation9 [shape = 'f32[1]{0:T(128)S(6)}', space=smem, size = 0x200, scoped, tag = 'prefetched SMEM operand 0']
  %s0 = inlined_call_operand.<no memory space> [shape: f32[1], index: 0, kind: input, shape index: {}]
  %s1 = inlined_call_operand.vmem [shape: bf16[128,32], index: 1, kind: input, shape index: {}]
  %s2 = inlined_call_operand.vmem [shape: bf16[128,32], index: 2, kind: input, shape index: {}]
  %s3 = inlined_call_operand.hbm [shape: f32[1,1], index: 3, kind: output, shape index: {}]
  %s4 = sld [smem:[#allocation0]]
  $region46: #{tpu_custom_call.1} parent=0
    _
  %s6 = ssub.s32 1, %s4
  %s7 = scalar_select 0, %s6, %s4
  %8 = sst [smem:[#allocation9]] %s0
  $region1: #{tpu_custom_call.1} parent=0
    #allocation10 [shape = 'u8[512]{0}', space=vmem, size = 0x400, scoped, tag = 'output window, operand 0, single buffered']
    #allocation11 [shape = 's32[1]{0}', space=sflag, size = 0x4, scoped, tag = 'scoped memory for tpu_custom_call.1']
    %9 = vsyncpa [#allocation11], 0
    // Predicated region
    $region2: #{tpu_custom_call.1} parent=1 // pred_check
      _
    $region3: #{tpu_custom_call.1} parent=1 // pred_check_branch
      %11 = sbr.rel (0) target = $region5
    $region4: #{tpu_custom_call.1} parent=1 // pred_region
      _
    $region5: #{tpu_custom_call.1} parent=1 // pred_fallthru
      _
    // Predicated region
    $region6: #{tpu_custom_call.1} parent=1 // pred_check
      _
    $region7: #{tpu_custom_call.1} parent=1 // pred_check_branch
      %13 = sbr.rel (0) target = $region9
    $region8: #{tpu_custom_call.1} parent=1 // pred_region
      _
    $region9: #{tpu_custom_call.1} parent=1 // pred_fallthru
      _
    %s14 = sld [smem:[#allocation9]]
    %p15 = scmp.eq.s32.totalorder 0, 0
    %p16 = scmp.eq.s32.totalorder 0, 0
    %p17 = pnand %p15, %p16
    %p18 = pneg %p17
    // Predicated region
    $region10: #{tpu_custom_call.1} parent=1 // pred_check
      _
    $region11: #{tpu_custom_call.1} parent=1 // pred_check_branch
      %20 = sbr.rel (%p17) target = $region13
    $region12: #{tpu_custom_call.1} parent=1 // pred_region
      %vm21 = vcmask 0
      %22 = vst.msk [vmem:[#allocation6] sm:$0x1] %vm21, 0.0
      %23 = vst.msk [vmem:[#allocation10] sm:$0x1] %vm21, 0.0
    $region13: #{tpu_custom_call.1} parent=1 // pred_fallthru
      _
    // Predicated region
    $region14: #{tpu_custom_call.1} parent=1 // pred_check
      %p24 = pneg %p16
    $region15: #{tpu_custom_call.1} parent=1 // pred_check_branch
      %26 = sbr.rel (%p24) target = $region17
    $region16: #{tpu_custom_call.1} parent=1 // pred_region
      %v27 = vld [vmem:[%s1] sm:$0xf]
      %v28 = vld [vmem:[%s1 + $0x4] sm:$0xf]
      %v29 = vld [vmem:[%s1 + $0x8] sm:$0xf]
      %v30 = vld [vmem:[%s1 + $0xc] sm:$0xf]
      %v31 = vld [vmem:[%s1 + $0x10] sm:$0xf]
      %v32 = vld [vmem:[%s1 + $0x14] sm:$0xf]
      %v33 = vld [vmem:[%s1 + $0x18] sm:$0xf]
      %v34 = vld [vmem:[%s1 + $0x1c] sm:$0xf]
      %v35 = vld [vmem:[%s1 + $0x20] sm:$0xf]
      %v36 = vld [vmem:[%s1 + $0x24] sm:$0xf]
      %v37 = vld [vmem:[%s1 + $0x28] sm:$0xf]
      %v38 = vld [vmem:[%s1 + $0x2c] sm:$0xf]
      %v39 = vld [vmem:[%s1 + $0x30] sm:$0xf]
      %v40 = vld [vmem:[%s1 + $0x34] sm:$0xf]
      %v41 = vld [vmem:[%s1 + $0x38] sm:$0xf]
      %v42 = vld [vmem:[%s1 + $0x3c] sm:$0xf]
      %v43 = vunpack.c.l.bf16 %v27
      %v44 = vunpack.c.l.bf16 %v28
      %v45 = vunpack.c.l.bf16 %v29
      %v46 = vunpack.c.l.bf16 %v30
      %v47 = vunpack.c.l.bf16 %v31
      %v48 = vunpack.c.l.bf16 %v32
      %v49 = vunpack.c.l.bf16 %v33
      %v50 = vunpack.c.l.bf16 %v34
      %v51 = vunpack.c.l.bf16 %v35
      %v52 = vunpack.c.l.bf16 %v36
      %v53 = vunpack.c.l.bf16 %v37
      %v54 = vunpack.c.l.bf16 %v38
      %v55 = vunpack.c.l.bf16 %v39
      %v56 = vunpack.c.l.bf16 %v40
      %v57 = vunpack.c.l.bf16 %v41
      %v58 = vunpack.c.l.bf16 %v42
      %v59 = vmul.f32 %v43, %v43
      %v60 = vmul.f32 %v44, %v44
      %v61 = vmul.f32 %v45, %v45
      %v62 = vmul.f32 %v46, %v46
      %v63 = vmul.f32 %v47, %v47
      %v64 = vmul.f32 %v48, %v48
      %v65 = vmul.f32 %v49, %v49
      %v66 = vmul.f32 %v50, %v50
      %v67 = vmul.f32 %v51, %v51
      %v68 = vmul.f32 %v52, %v52
      %v69 = vmul.f32 %v53, %v53
      %v70 = vmul.f32 %v54, %v54
      %v71 = vmul.f32 %v55, %v55
      %v72 = vmul.f32 %v56, %v56
      %v73 = vmul.f32 %v57, %v57
      %v74 = vmul.f32 %v58, %v58
      %vm75 = vcmask 261120
      %v76 = vsel %vm75, %v59, 0.0
      %77 = vadd.xlane.f32.xlu0 %v76
      %v78 = vpop.xlane.xlu0 %77
      %v79 = vsel %vm75, %v60, 0.0
      %80 = vadd.xlane.f32.xlu0 %v79
      %v81 = vpop.xlane.xlu0 %80
      %v82 = vsel %vm75, %v61, 0.0
      %83 = vadd.xlane.f32.xlu0 %v82
      %v84 = vpop.xlane.xlu0 %83
      %v85 = vsel %vm75, %v62, 0.0
      %86 = vadd.xlane.f32.xlu0 %v85
      %v87 = vpop.xlane.xlu0 %86
      %v88 = vsel %vm75, %v63, 0.0
      %89 = vadd.xlane.f32.xlu0 %v88
      %v90 = vpop.xlane.xlu0 %89
      %v91 = vsel %vm75, %v64, 0.0
      %92 = vadd.xlane.f32.xlu0 %v91
      %v93 = vpop.xlane.xlu0 %92
      %v94 = vsel %vm75, %v65, 0.0
      %95 = vadd.xlane.f32.xlu0 %v94
      %v96 = vpop.xlane.xlu0 %95
      %v97 = vsel %vm75, %v66, 0.0
      %98 = vadd.xlane.f32.xlu0 %v97
      %v99 = vpop.xlane.xlu0 %98
      %v100 = vsel %vm75, %v67, 0.0
      %101 = vadd.xlane.f32.xlu0 %v100
      %v102 = vpop.xlane.xlu0 %101
      %v103 = vsel %vm75, %v68, 0.0
      %104 = vadd.xlane.f32.xlu0 %v103
      %v105 = vpop.xlane.xlu0 %104
      %v106 = vsel %vm75, %v69, 0.0
      %107 = vadd.xlane.f32.xlu0 %v106
      %v108 = vpop.xlane.xlu0 %107
      %v109 = vsel %vm75, %v70, 0.0
      %110 = vadd.xlane.f32.xlu0 %v109
      %v111 = vpop.xlane.xlu0 %110
      %v112 = vsel %vm75, %v71, 0.0
      %113 = vadd.xlane.f32.xlu0 %v112
      %v114 = vpop.xlane.xlu0 %113
      %v115 = vsel %vm75, %v72, 0.0
      %116 = vadd.xlane.f32.xlu0 %v115
      %v117 = vpop.xlane.xlu0 %116
      %v118 = vsel %vm75, %v73, 0.0
      %119 = vadd.xlane.f32.xlu0 %v118
      %v120 = vpop.xlane.xlu0 %119
      %v121 = vsel %vm75, %v74, 0.0
      %122 = vadd.xlane.f32.xlu0 %v121
      %v123 = vpop.xlane.xlu0 %122
      %v124 = vmax.f32 %v78, 1e-24
      %v125 = vmax.f32 %v81, 1e-24
      %v126 = vmax.f32 %v84, 1e-24
      %v127 = vmax.f32 %v87, 1e-24
      %v128 = vmax.f32 %v90, 1e-24
      %v129 = vmax.f32 %v93, 1e-24
      %v130 = vmax.f32 %v96, 1e-24
      %v131 = vmax.f32 %v99, 1e-24
      %v132 = vmax.f32 %v102, 1e-24
      %v133 = vmax.f32 %v105, 1e-24
      %v134 = vmax.f32 %v108, 1e-24
      %v135 = vmax.f32 %v111, 1e-24
      %v136 = vmax.f32 %v114, 1e-24
      %v137 = vmax.f32 %v117, 1e-24
      %v138 = vmax.f32 %v120, 1e-24
      %v139 = vmax.f32 %v123, 1e-24
      %v140 = vrsqrt.pop %v124
      %v141 = vmul.f32 %v140, %v124
      %v142 = vmul.f32 %v141, %v140
      %v143 = vmul.f32 0.5, %v142
      %v144 = vsub.f32 1.5, %v143
      %v145 = vmul.f32 %v140, %v144
      %vm146 = vweird.f32 %v124
      %vm147 = vweird.f32 %v140
      %vm148 = vmor %vm146, %vm147
      %v149 = vsel %vm148, %v140, %v145
      %v150 = vrsqrt.pop %v125
      %v151 = vmul.f32 %v150, %v125
      %v152 = vmul.f32 %v151, %v150
      %v153 = vmul.f32 0.5, %v152
      %v154 = vsub.f32 1.5, %v153
      %v155 = vmul.f32 %v150, %v154
      %vm156 = vweird.f32 %v125
      %vm157 = vweird.f32 %v150
      %vm158 = vmor %vm156, %vm157
      %v159 = vsel %vm158, %v150, %v155
      %v160 = vrsqrt.pop %v126
      %v161 = vmul.f32 %v160, %v126
      %v162 = vmul.f32 %v161, %v160
      %v163 = vmul.f32 0.5, %v162
      %v164 = vsub.f32 1.5, %v163
      %v165 = vmul.f32 %v160, %v164
      %vm166 = vweird.f32 %v126
      %vm167 = vweird.f32 %v160
      %vm168 = vmor %vm166, %vm167
      %v169 = vsel %vm168, %v160, %v165
      %v170 = vrsqrt.pop %v127
      %v171 = vmul.f32 %v170, %v127
      %v172 = vmul.f32 %v171, %v170
      %v173 = vmul.f32 0.5, %v172
      %v174 = vsub.f32 1.5, %v173
      %v175 = vmul.f32 %v170, %v174
      %vm176 = vweird.f32 %v127
      %vm177 = vweird.f32 %v170
      %vm178 = vmor %vm176, %vm177
      %v179 = vsel %vm178, %v170, %v175
      %v180 = vrsqrt.pop %v128
      %v181 = vmul.f32 %v180, %v128
      %v182 = vmul.f32 %v181, %v180
      %v183 = vmul.f32 0.5, %v182
      %v184 = vsub.f32 1.5, %v183
      %v185 = vmul.f32 %v180, %v184
      %vm186 = vweird.f32 %v128
      %vm187 = vweird.f32 %v180
      %vm188 = vmor %vm186, %vm187
      %v189 = vsel %vm188, %v180, %v185
      %v190 = vrsqrt.pop %v129
      %v191 = vmul.f32 %v190, %v129
      %v192 = vmul.f32 %v191, %v190
      %v193 = vmul.f32 0.5, %v192
      %v194 = vsub.f32 1.5, %v193
      %v195 = vmul.f32 %v190, %v194
      %vm196 = vweird.f32 %v129
      %vm197 = vweird.f32 %v190
      %vm198 = vmor %vm196, %vm197
      %v199 = vsel %vm198, %v190, %v195
      %v200 = vrsqrt.pop %v130
      %v201 = vmul.f32 %v200, %v130
      %v202 = vmul.f32 %v201, %v200
      %v203 = vmul.f32 0.5, %v202
      %v204 = vsub.f32 1.5, %v203
      %v205 = vmul.f32 %v200, %v204
      %vm206 = vweird.f32 %v130
      %vm207 = vweird.f32 %v200
      %vm208 = vmor %vm206, %vm207
      %v209 = vsel %vm208, %v200, %v205
      %v210 = vrsqrt.pop %v131
      %v211 = vmul.f32 %v210, %v131
      %v212 = vmul.f32 %v211, %v210
      %v213 = vmul.f32 0.5, %v212
      %v214 = vsub.f32 1.5, %v213
      %v215 = vmul.f32 %v210, %v214
      %vm216 = vweird.f32 %v131
      %vm217 = vweird.f32 %v210
      %vm218 = vmor %vm216, %vm217
      %v219 = vsel %vm218, %v210, %v215
      %v220 = vrsqrt.pop %v132
      %v221 = vmul.f32 %v220, %v132
      %v222 = vmul.f32 %v221, %v220
      %v223 = vmul.f32 0.5, %v222
      %v224 = vsub.f32 1.5, %v223
      %v225 = vmul.f32 %v220, %v224
      %vm226 = vweird.f32 %v132
      %vm227 = vweird.f32 %v220
      %vm228 = vmor %vm226, %vm227
      %v229 = vsel %vm228, %v220, %v225
      %v230 = vrsqrt.pop %v133
      %v231 = vmul.f32 %v230, %v133
      %v232 = vmul.f32 %v231, %v230
      %v233 = vmul.f32 0.5, %v232
      %v234 = vsub.f32 1.5, %v233
      %v235 = vmul.f32 %v230, %v234
      %vm236 = vweird.f32 %v133
      %vm237 = vweird.f32 %v230
      %vm238 = vmor %vm236, %vm237
      %v239 = vsel %vm238, %v230, %v235
      %v240 = vrsqrt.pop %v134
      %v241 = vmul.f32 %v240, %v134
      %v242 = vmul.f32 %v241, %v240
      %v243 = vmul.f32 0.5, %v242
      %v244 = vsub.f32 1.5, %v243
      %v245 = vmul.f32 %v240, %v244
      %vm246 = vweird.f32 %v134
      %vm247 = vweird.f32 %v240
      %vm248 = vmor %vm246, %vm247
      %v249 = vsel %vm248, %v240, %v245
      %v250 = vrsqrt.pop %v135
      %v251 = vmul.f32 %v250, %v135
      %v252 = vmul.f32 %v251, %v250
      %v253 = vmul.f32 0.5, %v252
      %v254 = vsub.f32 1.5, %v253
      %v255 = vmul.f32 %v250, %v254
      %vm256 = vweird.f32 %v135
      %vm257 = vweird.f32 %v250
      %vm258 = vmor %vm256, %vm257
      %v259 = vsel %vm258, %v250, %v255
      %v260 = vrsqrt.pop %v136
      %v261 = vmul.f32 %v260, %v136
      %v262 = vmul.f32 %v261, %v260
      %v263 = vmul.f32 0.5, %v262
      %v264 = vsub.f32 1.5, %v263
      %v265 = vmul.f32 %v260, %v264
      %vm266 = vweird.f32 %v136
      %vm267 = vweird.f32 %v260
      %vm268 = vmor %vm266, %vm267
      %v269 = vsel %vm268, %v260, %v265
      %v270 = vrsqrt.pop %v137
      %v271 = vmul.f32 %v270, %v137
      %v272 = vmul.f32 %v271, %v270
      %v273 = vmul.f32 0.5, %v272
      %v274 = vsub.f32 1.5, %v273
      %v275 = vmul.f32 %v270, %v274
      %vm276 = vweird.f32 %v137
      %vm277 = vweird.f32 %v270
      %vm278 = vmor %vm276, %vm277
      %v279 = vsel %vm278, %v270, %v275
      %v280 = vrsqrt.pop %v138
      %v281 = vmul.f32 %v280, %v138
      %v282 = vmul.f32 %v281, %v280
      %v283 = vmul.f32 0.5, %v282
      %v284 = vsub.f32 1.5, %v283
      %v285 = vmul.f32 %v280, %v284
      %vm286 = vweird.f32 %v138
      %vm287 = vweird.f32 %v280
      %vm288 = vmor %vm286, %vm287
      %v289 = vsel %vm288, %v280, %v285
      %v290 = vrsqrt.pop %v139
      %v291 = vmul.f32 %v290, %v139
      %v292 = vmul.f32 %v291, %v290
      %v293 = vmul.f32 0.5, %v292
      %v294 = vsub.f32 1.5, %v293
      %v295 = vmul.f32 %v290, %v294
      %vm296 = vweird.f32 %v139
      %vm297 = vweird.f32 %v290
      %vm298 = vmor %vm296, %vm297
      %v299 = vsel %vm298, %v290, %v295
      %v300 = vmul.f32 %v43, %v149
      %v301 = vmul.f32 %v44, %v159
      %v302 = vmul.f32 %v45, %v169
      %v303 = vmul.f32 %v46, %v179
      %v304 = vmul.f32 %v47, %v189
      %v305 = vmul.f32 %v48, %v199
      %v306 = vmul.f32 %v49, %v209
      %v307 = vmul.f32 %v50, %v219
      %v308 = vmul.f32 %v51, %v229
      %v309 = vmul.f32 %v52, %v239
      %v310 = vmul.f32 %v53, %v249
      %v311 = vmul.f32 %v54, %v259
      %v312 = vmul.f32 %v55, %v269
      %v313 = vmul.f32 %v56, %v279
      %v314 = vmul.f32 %v57, %v289
      %v315 = vmul.f32 %v58, %v299
      %v316 = vstv %s14
      %v317 = vmul.f32 %v300, %v316
      %v318 = vmul.f32 %v301, %v316
      %v319 = vmul.f32 %v302, %v316
      %v320 = vmul.f32 %v303, %v316
      %v321 = vmul.f32 %v304, %v316
      %v322 = vmul.f32 %v305, %v316
      %v323 = vmul.f32 %v306, %v316
      %v324 = vmul.f32 %v307, %v316
      %v325 = vmul.f32 %v308, %v316
      %v326 = vmul.f32 %v309, %v316
      %v327 = vmul.f32 %v310, %v316
      %v328 = vmul.f32 %v311, %v316
      %v329 = vmul.f32 %v312, %v316
      %v330 = vmul.f32 %v313, %v316
      %v331 = vmul.f32 %v314, %v316
      %v332 = vmul.f32 %v315, %v316
      %v333 = vpack.c.bf16 %v317, %v317
      %v334 = vpack.c.bf16 %v318, %v318
      %v335 = vpack.c.bf16 %v319, %v319
      %v336 = vpack.c.bf16 %v320, %v320
      %v337 = vpack.c.bf16 %v321, %v321
      %v338 = vpack.c.bf16 %v322, %v322
      %v339 = vpack.c.bf16 %v323, %v323
      %v340 = vpack.c.bf16 %v324, %v324
      %v341 = vpack.c.bf16 %v325, %v325
      %v342 = vpack.c.bf16 %v326, %v326
      %v343 = vpack.c.bf16 %v327, %v327
      %v344 = vpack.c.bf16 %v328, %v328
      %v345 = vpack.c.bf16 %v329, %v329
      %v346 = vpack.c.bf16 %v330, %v330
      %v347 = vpack.c.bf16 %v331, %v331
      %v348 = vpack.c.bf16 %v332, %v332
      %vm349 = vcmask 257024
      %350 = vst.msk [vmem:[#allocation7] sm:$0xf] %vm349, %v333
      %351 = vst.msk [vmem:[#allocation7 + $0x4] sm:$0xf] %vm349, %v334
      %352 = vst.msk [vmem:[#allocation7 + $0x8] sm:$0xf] %vm349, %v335
      %353 = vst.msk [vmem:[#allocation7 + $0xc] sm:$0xf] %vm349, %v336
      %354 = vst.msk [vmem:[#allocation7 + $0x10] sm:$0xf] %vm349, %v337
      %355 = vst.msk [vmem:[#allocation7 + $0x14] sm:$0xf] %vm349, %v338
      %356 = vst.msk [vmem:[#allocation7 + $0x18] sm:$0xf] %vm349, %v339
      %357 = vst.msk [vmem:[#allocation7 + $0x1c] sm:$0xf] %vm349, %v340
      %358 = vst.msk [vmem:[#allocation7 + $0x20] sm:$0xf] %vm349, %v341
      %359 = vst.msk [vmem:[#allocation7 + $0x24] sm:$0xf] %vm349, %v342
      %360 = vst.msk [vmem:[#allocation7 + $0x28] sm:$0xf] %vm349, %v343
      %361 = vst.msk [vmem:[#allocation7 + $0x2c] sm:$0xf] %vm349, %v344
      %362 = vst.msk [vmem:[#allocation7 + $0x30] sm:$0xf] %vm349, %v345
      %363 = vst.msk [vmem:[#allocation7 + $0x34] sm:$0xf] %vm349, %v346
      %364 = vst.msk [vmem:[#allocation7 + $0x38] sm:$0xf] %vm349, %v347
      %365 = vst.msk [vmem:[#allocation7 + $0x3c] sm:$0xf] %vm349, %v348
    $region17: #{tpu_custom_call.1} parent=1 // pred_fallthru
      _
    %v366 = vld [vmem:[%s2] sm:$0xf]
    %v367 = vld [vmem:[%s2 + $0x4] sm:$0xf]
    %v368 = vld [vmem:[%s2 + $0x8] sm:$0xf]
    %v369 = vld [vmem:[%s2 + $0xc] sm:$0xf]
    %v370 = vld [vmem:[%s2 + $0x10] sm:$0xf]
    %v371 = vld [vmem:[%s2 + $0x14] sm:$0xf]
    %v372 = vld [vmem:[%s2 + $0x18] sm:$0xf]
    %v373 = vld [vmem:[%s2 + $0x1c] sm:$0xf]
    %v374 = vld [vmem:[%s2 + $0x20] sm:$0xf]
    %v375 = vld [vmem:[%s2 + $0x24] sm:$0xf]
    %v376 = vld [vmem:[%s2 + $0x28] sm:$0xf]
    %v377 = vld [vmem:[%s2 + $0x2c] sm:$0xf]
    %v378 = vld [vmem:[%s2 + $0x30] sm:$0xf]
    %v379 = vld [vmem:[%s2 + $0x34] sm:$0xf]
    %v380 = vld [vmem:[%s2 + $0x38] sm:$0xf]
    %v381 = vld [vmem:[%s2 + $0x3c] sm:$0xf]
    %v382 = vunpack.c.l.bf16 %v366
    %v383 = vunpack.c.l.bf16 %v367
    %v384 = vunpack.c.l.bf16 %v368
    %v385 = vunpack.c.l.bf16 %v369
    %v386 = vunpack.c.l.bf16 %v370
    %v387 = vunpack.c.l.bf16 %v371
    %v388 = vunpack.c.l.bf16 %v372
    %v389 = vunpack.c.l.bf16 %v373
    %v390 = vunpack.c.l.bf16 %v374
    %v391 = vunpack.c.l.bf16 %v375
    %v392 = vunpack.c.l.bf16 %v376
    %v393 = vunpack.c.l.bf16 %v377
    %v394 = vunpack.c.l.bf16 %v378
    %v395 = vunpack.c.l.bf16 %v379
    %v396 = vunpack.c.l.bf16 %v380
    %v397 = vunpack.c.l.bf16 %v381
    %v398 = vmul.f32 %v382, %v382
    %v399 = vmul.f32 %v383, %v383
    %v400 = vmul.f32 %v384, %v384
    %v401 = vmul.f32 %v385, %v385
    %v402 = vmul.f32 %v386, %v386
    %v403 = vmul.f32 %v387, %v387
    %v404 = vmul.f32 %v388, %v388
    %v405 = vmul.f32 %v389, %v389
    %v406 = vmul.f32 %v390, %v390
    %v407 = vmul.f32 %v391, %v391
    %v408 = vmul.f32 %v392, %v392
    %v409 = vmul.f32 %v393, %v393
    %v410 = vmul.f32 %v394, %v394
    %v411 = vmul.f32 %v395, %v395
    %v412 = vmul.f32 %v396, %v396
    %v413 = vmul.f32 %v397, %v397
    %vm414 = vcmask 261120
    %v415 = vsel %vm414, %v398, 0.0
    %416 = vadd.xlane.f32.xlu0 %v415
    %v417 = vpop.xlane.xlu0 %416
    %v418 = vsel %vm414, %v399, 0.0
    %419 = vadd.xlane.f32.xlu0 %v418
    %v420 = vpop.xlane.xlu0 %419
    %v421 = vsel %vm414, %v400, 0.0
    %422 = vadd.xlane.f32.xlu0 %v421
    %v423 = vpop.xlane.xlu0 %422
    %v424 = vsel %vm414, %v401, 0.0
    %425 = vadd.xlane.f32.xlu0 %v424
    %v426 = vpop.xlane.xlu0 %425
    %v427 = vsel %vm414, %v402, 0.0
    %428 = vadd.xlane.f32.xlu0 %v427
    %v429 = vpop.xlane.xlu0 %428
    %v430 = vsel %vm414, %v403, 0.0
    %431 = vadd.xlane.f32.xlu0 %v430
    %v432 = vpop.xlane.xlu0 %431
    %v433 = vsel %vm414, %v404, 0.0
    %434 = vadd.xlane.f32.xlu0 %v433
    %v435 = vpop.xlane.xlu0 %434
    %v436 = vsel %vm414, %v405, 0.0
    %437 = vadd.xlane.f32.xlu0 %v436
    %v438 = vpop.xlane.xlu0 %437
    %v439 = vsel %vm414, %v406, 0.0
    %440 = vadd.xlane.f32.xlu0 %v439
    %v441 = vpop.xlane.xlu0 %440
    %v442 = vsel %vm414, %v407, 0.0
    %443 = vadd.xlane.f32.xlu0 %v442
    %v444 = vpop.xlane.xlu0 %443
    %v445 = vsel %vm414, %v408, 0.0
    %446 = vadd.xlane.f32.xlu0 %v445
    %v447 = vpop.xlane.xlu0 %446
    %v448 = vsel %vm414, %v409, 0.0
    %449 = vadd.xlane.f32.xlu0 %v448
    %v450 = vpop.xlane.xlu0 %449
    %v451 = vsel %vm414, %v410, 0.0
    %452 = vadd.xlane.f32.xlu0 %v451
    %v453 = vpop.xlane.xlu0 %452
    %v454 = vsel %vm414, %v411, 0.0
    %455 = vadd.xlane.f32.xlu0 %v454
    %v456 = vpop.xlane.xlu0 %455
    %v457 = vsel %vm414, %v412, 0.0
    %458 = vadd.xlane.f32.xlu0 %v457
    %v459 = vpop.xlane.xlu0 %458
    %v460 = vsel %vm414, %v413, 0.0
    %461 = vadd.xlane.f32.xlu0 %v460
    %v462 = vpop.xlane.xlu0 %461
    %v463 = vmax.f32 %v417, 1e-24
    %v464 = vmax.f32 %v420, 1e-24
    %v465 = vmax.f32 %v423, 1e-24
    %v466 = vmax.f32 %v426, 1e-24
    %v467 = vmax.f32 %v429, 1e-24
    %v468 = vmax.f32 %v432, 1e-24
    %v469 = vmax.f32 %v435, 1e-24
    %v470 = vmax.f32 %v438, 1e-24
    %v471 = vmax.f32 %v441, 1e-24
    %v472 = vmax.f32 %v444, 1e-24
    %v473 = vmax.f32 %v447, 1e-24
    %v474 = vmax.f32 %v450, 1e-24
    %v475 = vmax.f32 %v453, 1e-24
    %v476 = vmax.f32 %v456, 1e-24
    %v477 = vmax.f32 %v459, 1e-24
    %v478 = vmax.f32 %v462, 1e-24
    %v479 = vrsqrt.pop %v463
    %v480 = vmul.f32 %v479, %v463
    %v481 = vmul.f32 %v480, %v479
    %v482 = vmul.f32 0.5, %v481
    %v483 = vsub.f32 1.5, %v482
    %v484 = vmul.f32 %v479, %v483
    %vm485 = vweird.f32 %v463
    %vm486 = vweird.f32 %v479
    %vm487 = vmor %vm485, %vm486
    %v488 = vsel %vm487, %v479, %v484
    %v489 = vrsqrt.pop %v464
    %v490 = vmul.f32 %v489, %v464
    %v491 = vmul.f32 %v490, %v489
    %v492 = vmul.f32 0.5, %v491
    %v493 = vsub.f32 1.5, %v492
    %v494 = vmul.f32 %v489, %v493
    %vm495 = vweird.f32 %v464
    %vm496 = vweird.f32 %v489
    %vm497 = vmor %vm495, %vm496
    %v498 = vsel %vm497, %v489, %v494
    %v499 = vrsqrt.pop %v465
    %v500 = vmul.f32 %v499, %v465
    %v501 = vmul.f32 %v500, %v499
    %v502 = vmul.f32 0.5, %v501
    %v503 = vsub.f32 1.5, %v502
    %v504 = vmul.f32 %v499, %v503
    %vm505 = vweird.f32 %v465
    %vm506 = vweird.f32 %v499
    %vm507 = vmor %vm505, %vm506
    %v508 = vsel %vm507, %v499, %v504
    %v509 = vrsqrt.pop %v466
    %v510 = vmul.f32 %v509, %v466
    %v511 = vmul.f32 %v510, %v509
    %v512 = vmul.f32 0.5, %v511
    %v513 = vsub.f32 1.5, %v512
    %v514 = vmul.f32 %v509, %v513
    %vm515 = vweird.f32 %v466
    %vm516 = vweird.f32 %v509
    %vm517 = vmor %vm515, %vm516
    %v518 = vsel %vm517, %v509, %v514
    %v519 = vrsqrt.pop %v467
    %v520 = vmul.f32 %v519, %v467
    %v521 = vmul.f32 %v520, %v519
    %v522 = vmul.f32 0.5, %v521
    %v523 = vsub.f32 1.5, %v522
    %v524 = vmul.f32 %v519, %v523
    %vm525 = vweird.f32 %v467
    %vm526 = vweird.f32 %v519
    %vm527 = vmor %vm525, %vm526
    %v528 = vsel %vm527, %v519, %v524
    %v529 = vrsqrt.pop %v468
    %v530 = vmul.f32 %v529, %v468
    %v531 = vmul.f32 %v530, %v529
    %v532 = vmul.f32 0.5, %v531
    %v533 = vsub.f32 1.5, %v532
    %v534 = vmul.f32 %v529, %v533
    %vm535 = vweird.f32 %v468
    %vm536 = vweird.f32 %v529
    %vm537 = vmor %vm535, %vm536
    %v538 = vsel %vm537, %v529, %v534
    %v539 = vrsqrt.pop %v469
    %v540 = vmul.f32 %v539, %v469
    %v541 = vmul.f32 %v540, %v539
    %v542 = vmul.f32 0.5, %v541
    %v543 = vsub.f32 1.5, %v542
    %v544 = vmul.f32 %v539, %v543
    %vm545 = vweird.f32 %v469
    %vm546 = vweird.f32 %v539
    %vm547 = vmor %vm545, %vm546
    %v548 = vsel %vm547, %v539, %v544
    %v549 = vrsqrt.pop %v470
    %v550 = vmul.f32 %v549, %v470
    %v551 = vmul.f32 %v550, %v549
    %v552 = vmul.f32 0.5, %v551
    %v553 = vsub.f32 1.5, %v552
    %v554 = vmul.f32 %v549, %v553
    %vm555 = vweird.f32 %v470
    %vm556 = vweird.f32 %v549
    %vm557 = vmor %vm555, %vm556
    %v558 = vsel %vm557, %v549, %v554
    %v559 = vrsqrt.pop %v471
    %v560 = vmul.f32 %v559, %v471
    %v561 = vmul.f32 %v560, %v559
    %v562 = vmul.f32 0.5, %v561
    %v563 = vsub.f32 1.5, %v562
    %v564 = vmul.f32 %v559, %v563
    %vm565 = vweird.f32 %v471
    %vm566 = vweird.f32 %v559
    %vm567 = vmor %vm565, %vm566
    %v568 = vsel %vm567, %v559, %v564
    %v569 = vrsqrt.pop %v472
    %v570 = vmul.f32 %v569, %v472
    %v571 = vmul.f32 %v570, %v569
    %v572 = vmul.f32 0.5, %v571
    %v573 = vsub.f32 1.5, %v572
    %v574 = vmul.f32 %v569, %v573
    %vm575 = vweird.f32 %v472
    %vm576 = vweird.f32 %v569
    %vm577 = vmor %vm575, %vm576
    %v578 = vsel %vm577, %v569, %v574
    %v579 = vrsqrt.pop %v473
    %v580 = vmul.f32 %v579, %v473
    %v581 = vmul.f32 %v580, %v579
    %v582 = vmul.f32 0.5, %v581
    %v583 = vsub.f32 1.5, %v582
    %v584 = vmul.f32 %v579, %v583
    %vm585 = vweird.f32 %v473
    %vm586 = vweird.f32 %v579
    %vm587 = vmor %vm585, %vm586
    %v588 = vsel %vm587, %v579, %v584
    %v589 = vrsqrt.pop %v474
    %v590 = vmul.f32 %v589, %v474
    %v591 = vmul.f32 %v590, %v589
    %v592 = vmul.f32 0.5, %v591
    %v593 = vsub.f32 1.5, %v592
    %v594 = vmul.f32 %v589, %v593
    %vm595 = vweird.f32 %v474
    %vm596 = vweird.f32 %v589
    %vm597 = vmor %vm595, %vm596
    %v598 = vsel %vm597, %v589, %v594
    %v599 = vrsqrt.pop %v475
    %v600 = vmul.f32 %v599, %v475
    %v601 = vmul.f32 %v600, %v599
    %v602 = vmul.f32 0.5, %v601
    %v603 = vsub.f32 1.5, %v602
    %v604 = vmul.f32 %v599, %v603
    %vm605 = vweird.f32 %v475
    %vm606 = vweird.f32 %v599
    %vm607 = vmor %vm605, %vm606
    %v608 = vsel %vm607, %v599, %v604
    %v609 = vrsqrt.pop %v476
    %v610 = vmul.f32 %v609, %v476
    %v611 = vmul.f32 %v610, %v609
    %v612 = vmul.f32 0.5, %v611
    %v613 = vsub.f32 1.5, %v612
    %v614 = vmul.f32 %v609, %v613
    %vm615 = vweird.f32 %v476
    %vm616 = vweird.f32 %v609
    %vm617 = vmor %vm615, %vm616
    %v618 = vsel %vm617, %v609, %v614
    %v619 = vrsqrt.pop %v477
    %v620 = vmul.f32 %v619, %v477
    %v621 = vmul.f32 %v620, %v619
    %v622 = vmul.f32 0.5, %v621
    %v623 = vsub.f32 1.5, %v622
    %v624 = vmul.f32 %v619, %v623
    %vm625 = vweird.f32 %v477
    %vm626 = vweird.f32 %v619
    %vm627 = vmor %vm625, %vm626
    %v628 = vsel %vm627, %v619, %v624
    %v629 = vrsqrt.pop %v478
    %v630 = vmul.f32 %v629, %v478
    %v631 = vmul.f32 %v630, %v629
    %v632 = vmul.f32 0.5, %v631
    %v633 = vsub.f32 1.5, %v632
    %v634 = vmul.f32 %v629, %v633
    %vm635 = vweird.f32 %v478
    %vm636 = vweird.f32 %v629
    %vm637 = vmor %vm635, %vm636
    %v638 = vsel %vm637, %v629, %v634
    %v639 = vmul.f32 %v382, %v488
    %v640 = vmul.f32 %v383, %v498
    %v641 = vmul.f32 %v384, %v508
    %v642 = vmul.f32 %v385, %v518
    %v643 = vmul.f32 %v386, %v528
    %v644 = vmul.f32 %v387, %v538
    %v645 = vmul.f32 %v388, %v548
    %v646 = vmul.f32 %v389, %v558
    %v647 = vmul.f32 %v390, %v568
    %v648 = vmul.f32 %v391, %v578
    %v649 = vmul.f32 %v392, %v588
    %v650 = vmul.f32 %v393, %v598
    %v651 = vmul.f32 %v394, %v608
    %v652 = vmul.f32 %v395, %v618
    %v653 = vmul.f32 %v396, %v628
    %v654 = vmul.f32 %v397, %v638
    %v655 = vpack.c.bf16 %v640, %v639
    %v656 = vpack.c.bf16 %v642, %v641
    %v657 = vpack.c.bf16 %v644, %v643
    %v658 = vpack.c.bf16 %v646, %v645
    %v659 = vpack.c.bf16 %v648, %v647
    %v660 = vpack.c.bf16 %v650, %v649
    %v661 = vpack.c.bf16 %v652, %v651
    %v662 = vpack.c.bf16 %v654, %v653
    %v663 = vld [vmem:[#allocation7] sm:$0xf]
    %v664 = vld [vmem:[#allocation7 + $0x4] sm:$0xf]
    %v665 = vld [vmem:[#allocation7 + $0x8] sm:$0xf]
    %v666 = vld [vmem:[#allocation7 + $0xc] sm:$0xf]
    %v667 = vld [vmem:[#allocation7 + $0x10] sm:$0xf]
    %v668 = vld [vmem:[#allocation7 + $0x14] sm:$0xf]
    %v669 = vld [vmem:[#allocation7 + $0x18] sm:$0xf]
    %v670 = vld [vmem:[#allocation7 + $0x1c] sm:$0xf]
    %v671 = vld [vmem:[#allocation7 + $0x20] sm:$0xf]
    %v672 = vld [vmem:[#allocation7 + $0x24] sm:$0xf]
    %v673 = vld [vmem:[#allocation7 + $0x28] sm:$0xf]
    %v674 = vld [vmem:[#allocation7 + $0x2c] sm:$0xf]
    %v675 = vld [vmem:[#allocation7 + $0x30] sm:$0xf]
    %v676 = vld [vmem:[#allocation7 + $0x34] sm:$0xf]
    %v677 = vld [vmem:[#allocation7 + $0x38] sm:$0xf]
    %v678 = vld [vmem:[#allocation7 + $0x3c] sm:$0xf]
    %v695 = vunpack.c.l.b16 %v663
    %v696 = vunpack.c.l.b16 %v664
    %v697 = vunpack.c.l.b16 %v665
    %v698 = vunpack.c.l.b16 %v666
    %v699 = vunpack.c.l.b16 %v667
    %v700 = vunpack.c.l.b16 %v668
    %v701 = vunpack.c.l.b16 %v669
    %v702 = vunpack.c.l.b16 %v670
    %v703 = vunpack.c.l.b16 %v671
    %v704 = vunpack.c.l.b16 %v672
    %v705 = vunpack.c.l.b16 %v673
    %v706 = vunpack.c.l.b16 %v674
    %v707 = vunpack.c.l.b16 %v675
    %v708 = vunpack.c.l.b16 %v676
    %v709 = vunpack.c.l.b16 %v677
    %v710 = vunpack.c.l.b16 %v678
    %v711 = vpack.c.b16 %v696, %v695
    %v712 = vpack.c.b16 %v698, %v697
    %v713 = vpack.c.b16 %v700, %v699
    %v714 = vpack.c.b16 %v702, %v701
    %v715 = vpack.c.b16 %v704, %v703
    %v716 = vpack.c.b16 %v706, %v705
    %v717 = vpack.c.b16 %v708, %v707
    %v718 = vpack.c.b16 %v710, %v709
    %v720 = vsel %vm414, %v711, 0
    %v723 = vsel %vm414, %v712, 0
    %v726 = vsel %vm414, %v713, 0
    %v729 = vsel %vm414, %v714, 0
    %v732 = vsel %vm414, %v715, 0
    %v735 = vsel %vm414, %v716, 0
    %v738 = vsel %vm414, %v717, 0
    %v741 = vsel %vm414, %v718, 0
    %v744 = vsel %vm414, %v655, 0
    %v747 = vsel %vm414, %v656, 0
    %v750 = vsel %vm414, %v657, 0
    %v753 = vsel %vm414, %v658, 0
    %v756 = vsel %vm414, %v659, 0
    %v759 = vsel %vm414, %v660, 0
    %v762 = vsel %vm414, %v661, 0
    %v765 = vsel %vm414, %v662, 0
    %767 = vmatpush.bf16.xpose.msra.mxu0 %v765
    %768 = vmatpush.bf16.xpose.msra.mxu0 %v762
    %769 = vmatpush.bf16.xpose.msra.mxu0 %v759
    %770 = vmatpush.bf16.xpose.msra.mxu0 %v756
    %771 = vmatpush.bf16.xpose.msra.mxu0 %v753
    %772 = vmatpush.bf16.xpose.msra.mxu0 %v750
    %773 = vmatpush.bf16.xpose.msra.mxu0 %v747
    %774 = vmatpush.bf16.xpose.msra.mxu0 %v744
    %775 = vmatmul.bf16.gmra.mxu0 %v720
    %v776 = vpop.f32.mrf.mxu0
    %v777 = vadd.f32 0.0, %v776
    %v778 = vpop.f32.mrf.mxu0
    %v779 = vadd.f32 0.0, %v778
    %780 = vmatmul.bf16.gmra.mxu0 %v723
    %v781 = vpop.f32.mrf.mxu0
    %v782 = vadd.f32 0.0, %v781
    %v783 = vpop.f32.mrf.mxu0
    %v784 = vadd.f32 0.0, %v783
    %785 = vmatmul.bf16.gmra.mxu0 %v726
    %v786 = vpop.f32.mrf.mxu0
    %v787 = vadd.f32 0.0, %v786
    %v788 = vpop.f32.mrf.mxu0
    %v789 = vadd.f32 0.0, %v788
    %790 = vmatmul.bf16.gmra.mxu0 %v729
    %v791 = vpop.f32.mrf.mxu0
    %v792 = vadd.f32 0.0, %v791
    %v793 = vpop.f32.mrf.mxu0
    %v794 = vadd.f32 0.0, %v793
    %795 = vmatmul.bf16.gmra.mxu0 %v732
    %v796 = vpop.f32.mrf.mxu0
    %v797 = vadd.f32 0.0, %v796
    %v798 = vpop.f32.mrf.mxu0
    %v799 = vadd.f32 0.0, %v798
    %800 = vmatmul.bf16.gmra.mxu0 %v735
    %v801 = vpop.f32.mrf.mxu0
    %v802 = vadd.f32 0.0, %v801
    %v803 = vpop.f32.mrf.mxu0
    %v804 = vadd.f32 0.0, %v803
    %805 = vmatmul.bf16.gmra.mxu0 %v738
    %v806 = vpop.f32.mrf.mxu0
    %v807 = vadd.f32 0.0, %v806
    %v808 = vpop.f32.mrf.mxu0
    %v809 = vadd.f32 0.0, %v808
    %810 = vmatmul.bf16.gmra.mxu0 %v741
    %v811 = vpop.f32.mrf.mxu0
    %v812 = vadd.f32 0.0, %v811
    %v813 = vpop.f32.mrf.mxu0
    %v814 = vadd.f32 0.0, %v813
    %815 = vdwg.mxu0
    %v816 = vlaneseq
    %v817 = vshrl.u32 %v816, 7
    %v818 = vadd.s32 %v817, 8
    %v819 = vadd.s32 %v817, 16
    %v820 = vadd.s32 %v817, 24
    %v821 = vadd.s32 %v817, 32
    %v822 = vadd.s32 %v817, 40
    %v823 = vadd.s32 %v817, 48
    %v824 = vadd.s32 %v817, 56
    %v825 = vadd.s32 %v817, 64
    %v826 = vadd.s32 %v817, 72
    %v827 = vadd.s32 %v817, 80
    %v828 = vadd.s32 %v817, 88
    %v829 = vadd.s32 %v817, 96
    %v830 = vadd.s32 %v817, 104
    %v831 = vadd.s32 %v817, 112
    %v832 = vadd.s32 %v817, 120
    %s833 = smul.u32 0, 128
    %v834 = vstv %s833
    %v835 = vadd.s32 %v817, %v834
    %v836 = vadd.s32 %v818, %v834
    %v837 = vadd.s32 %v819, %v834
    %v838 = vadd.s32 %v820, %v834
    %v839 = vadd.s32 %v821, %v834
    %v840 = vadd.s32 %v822, %v834
    %v841 = vadd.s32 %v823, %v834
    %v842 = vadd.s32 %v824, %v834
    %v843 = vadd.s32 %v825, %v834
    %v844 = vadd.s32 %v826, %v834
    %v845 = vadd.s32 %v827, %v834
    %v846 = vadd.s32 %v828, %v834
    %v847 = vadd.s32 %v829, %v834
    %v848 = vadd.s32 %v830, %v834
    %v849 = vadd.s32 %v831, %v834
    %v850 = vadd.s32 %v832, %v834
    %v851 = vlaneseq
    %v852 = vand.u32 %v851, 127
    %s853 = smul.u32 0, 128
    %v854 = vstv %s853
    %v855 = vadd.s32 %v852, %v854
    %vm856 = vcmp.lt.s32.totalorder %v835, 8
    %vm857 = vcmp.lt.s32.totalorder %v836, 8
    %vm858 = vcmp.lt.s32.totalorder %v837, 8
    %vm859 = vcmp.lt.s32.totalorder %v838, 8
    %vm860 = vcmp.lt.s32.totalorder %v839, 8
    %vm861 = vcmp.lt.s32.totalorder %v840, 8
    %vm862 = vcmp.lt.s32.totalorder %v841, 8
    %vm863 = vcmp.lt.s32.totalorder %v842, 8
    %vm864 = vcmp.lt.s32.totalorder %v843, 8
    %vm865 = vcmp.lt.s32.totalorder %v844, 8
    %vm866 = vcmp.lt.s32.totalorder %v845, 8
    %vm867 = vcmp.lt.s32.totalorder %v846, 8
    %vm868 = vcmp.lt.s32.totalorder %v847, 8
    %vm869 = vcmp.lt.s32.totalorder %v848, 8
    %vm870 = vcmp.lt.s32.totalorder %v849, 8
    %vm871 = vcmp.lt.s32.totalorder %v850, 8
    %vm872 = vcmp.lt.s32.totalorder %v855, 8
    %v873 = vsel %vm872, 1, 0
    %vm874 = vcmp.eq.s32.totalorder %v873, 1
    %v875 = vsel %vm874, %v777, -1e+30
    %v876 = vsel %vm874, %v779, -1e+30
    %v877 = vsel %vm874, %v782, -1e+30
    %v878 = vsel %vm874, %v784, -1e+30
    %v879 = vsel %vm874, %v787, -1e+30
    %v880 = vsel %vm874, %v789, -1e+30
    %v881 = vsel %vm874, %v792, -1e+30
    %v882 = vsel %vm874, %v794, -1e+30
    %v883 = vsel %vm874, %v797, -1e+30
    %v884 = vsel %vm874, %v799, -1e+30
    %v885 = vsel %vm874, %v802, -1e+30
    %v886 = vsel %vm874, %v804, -1e+30
    %v887 = vsel %vm874, %v807, -1e+30
    %v888 = vsel %vm874, %v809, -1e+30
    %v889 = vsel %vm874, %v812, -1e+30
    %v890 = vsel %vm874, %v814, -1e+30
    // Predicated region
    $region18: #{tpu_custom_call.1} parent=1 // pred_check
      %p891 = pneg %p16
    $region19: #{tpu_custom_call.1} parent=1 // pred_check_branch
      %893 = sbr.rel (%p891) target = $region21
    $region20: #{tpu_custom_call.1} parent=1 // pred_region
      %vm894 = vcmask 7168
      %895 = vst.msk [vmem:[#allocation2] sm:$0xff] %vm894, -1e+30
      %896 = vst.msk [vmem:[#allocation2 + $0x8] sm:$0xff] %vm894, -1e+30
      %897 = vst.msk [vmem:[#allocation2 + $0x10] sm:$0xff] %vm894, -1e+30
      %898 = vst.msk [vmem:[#allocation2 + $0x18] sm:$0xff] %vm894, -1e+30
      %899 = vst.msk [vmem:[#allocation2 + $0x20] sm:$0xff] %vm894, -1e+30
      %900 = vst.msk [vmem:[#allocation2 + $0x28] sm:$0xff] %vm894, -1e+30
      %901 = vst.msk [vmem:[#allocation2 + $0x30] sm:$0xff] %vm894, -1e+30
      %902 = vst.msk [vmem:[#allocation2 + $0x38] sm:$0xff] %vm894, -1e+30
      %903 = vst.msk [vmem:[#allocation2 + $0x40] sm:$0xff] %vm894, -1e+30
      %904 = vst.msk [vmem:[#allocation2 + $0x48] sm:$0xff] %vm894, -1e+30
      %905 = vst.msk [vmem:[#allocation2 + $0x50] sm:$0xff] %vm894, -1e+30
      %906 = vst.msk [vmem:[#allocation2 + $0x58] sm:$0xff] %vm894, -1e+30
      %907 = vst.msk [vmem:[#allocation2 + $0x60] sm:$0xff] %vm894, -1e+30
      %908 = vst.msk [vmem:[#allocation2 + $0x68] sm:$0xff] %vm894, -1e+30
      %909 = vst.msk [vmem:[#allocation2 + $0x70] sm:$0xff] %vm894, -1e+30
      %910 = vst.msk [vmem:[#allocation2 + $0x78] sm:$0xff] %vm894, -1e+30
      %911 = vst.msk [vmem:[#allocation3] sm:$0xff] %vm894, 0.0
      %912 = vst.msk [vmem:[#allocation3 + $0x8] sm:$0xff] %vm894, 0.0
      %913 = vst.msk [vmem:[#allocation3 + $0x10] sm:$0xff] %vm894, 0.0
      %914 = vst.msk [vmem:[#allocation3 + $0x18] sm:$0xff] %vm894, 0.0
      %915 = vst.msk [vmem:[#allocation3 + $0x20] sm:$0xff] %vm894, 0.0
      %916 = vst.msk [vmem:[#allocation3 + $0x28] sm:$0xff] %vm894, 0.0
      %917 = vst.msk [vmem:[#allocation3 + $0x30] sm:$0xff] %vm894, 0.0
      %918 = vst.msk [vmem:[#allocation3 + $0x38] sm:$0xff] %vm894, 0.0
      %919 = vst.msk [vmem:[#allocation3 + $0x40] sm:$0xff] %vm894, 0.0
      %920 = vst.msk [vmem:[#allocation3 + $0x48] sm:$0xff] %vm894, 0.0
      %921 = vst.msk [vmem:[#allocation3 + $0x50] sm:$0xff] %vm894, 0.0
      %922 = vst.msk [vmem:[#allocation3 + $0x58] sm:$0xff] %vm894, 0.0
      %923 = vst.msk [vmem:[#allocation3 + $0x60] sm:$0xff] %vm894, 0.0
      %924 = vst.msk [vmem:[#allocation3 + $0x68] sm:$0xff] %vm894, 0.0
      %925 = vst.msk [vmem:[#allocation3 + $0x70] sm:$0xff] %vm894, 0.0
      %926 = vst.msk [vmem:[#allocation3 + $0x78] sm:$0xff] %vm894, 0.0
    $region21: #{tpu_custom_call.1} parent=1 // pred_fallthru
      _
    %927 = vmax.xlane.f32.xlu0 %v875
    %v928 = vpop.xlane.xlu0 %927
    %929 = vmax.xlane.f32.xlu0 %v876
    %v930 = vpop.xlane.xlu0 %929
    %931 = vmax.xlane.f32.xlu0 %v877
    %v932 = vpop.xlane.xlu0 %931
    %933 = vmax.xlane.f32.xlu0 %v878
    %v934 = vpop.xlane.xlu0 %933
    %935 = vmax.xlane.f32.xlu0 %v879
    %v936 = vpop.xlane.xlu0 %935
    %937 = vmax.xlane.f32.xlu0 %v880
    %v938 = vpop.xlane.xlu0 %937
    %939 = vmax.xlane.f32.xlu0 %v881
    %v940 = vpop.xlane.xlu0 %939
    %941 = vmax.xlane.f32.xlu0 %v882
    %v942 = vpop.xlane.xlu0 %941
    %943 = vmax.xlane.f32.xlu0 %v883
    %v944 = vpop.xlane.xlu0 %943
    %945 = vmax.xlane.f32.xlu0 %v884
    %v946 = vpop.xlane.xlu0 %945
    %947 = vmax.xlane.f32.xlu0 %v885
    %v948 = vpop.xlane.xlu0 %947
    %949 = vmax.xlane.f32.xlu0 %v886
    %v950 = vpop.xlane.xlu0 %949
    %951 = vmax.xlane.f32.xlu0 %v887
    %v952 = vpop.xlane.xlu0 %951
    %953 = vmax.xlane.f32.xlu0 %v888
    %v954 = vpop.xlane.xlu0 %953
    %955 = vmax.xlane.f32.xlu0 %v889
    %v956 = vpop.xlane.xlu0 %955
    %957 = vmax.xlane.f32.xlu0 %v890
    %v958 = vpop.xlane.xlu0 %957
    %v959 = vld [vmem:[#allocation2] sm:$0xff]
    %v960 = vld [vmem:[#allocation2 + $0x8] sm:$0xff]
    %v961 = vld [vmem:[#allocation2 + $0x10] sm:$0xff]
    %v962 = vld [vmem:[#allocation2 + $0x18] sm:$0xff]
    %v963 = vld [vmem:[#allocation2 + $0x20] sm:$0xff]
    %v964 = vld [vmem:[#allocation2 + $0x28] sm:$0xff]
    %v965 = vld [vmem:[#allocation2 + $0x30] sm:$0xff]
    %v966 = vld [vmem:[#allocation2 + $0x38] sm:$0xff]
    %v967 = vld [vmem:[#allocation2 + $0x40] sm:$0xff]
    %v968 = vld [vmem:[#allocation2 + $0x48] sm:$0xff]
    %v969 = vld [vmem:[#allocation2 + $0x50] sm:$0xff]
    %v970 = vld [vmem:[#allocation2 + $0x58] sm:$0xff]
    %v971 = vld [vmem:[#allocation2 + $0x60] sm:$0xff]
    %v972 = vld [vmem:[#allocation2 + $0x68] sm:$0xff]
    %v973 = vld [vmem:[#allocation2 + $0x70] sm:$0xff]
    %v974 = vld [vmem:[#allocation2 + $0x78] sm:$0xff]
    %v975 = vmax.f32 %v959, %v928
    %v976 = vmax.f32 %v960, %v930
    %v977 = vmax.f32 %v961, %v932
    %v978 = vmax.f32 %v962, %v934
    %v979 = vmax.f32 %v963, %v936
    %v980 = vmax.f32 %v964, %v938
    %v981 = vmax.f32 %v965, %v940
    %v982 = vmax.f32 %v966, %v942
    %v983 = vmax.f32 %v967, %v944
    %v984 = vmax.f32 %v968, %v946
    %v985 = vmax.f32 %v969, %v948
    %v986 = vmax.f32 %v970, %v950
    %v987 = vmax.f32 %v971, %v952
    %v988 = vmax.f32 %v972, %v954
    %v989 = vmax.f32 %v973, %v956
    %v990 = vmax.f32 %v974, %v958
    %992 = vset.pattern.permute.xlu0 0
    %993 = vperm.xlu0 %992, %v975
    %v994 = vpop.permute.xlu0 %993
    %997 = vset.pattern.permute.xlu0 0
    %998 = vperm.xlu0 %997, %v976
    %v999 = vpop.permute.xlu0 %998
    %1002 = vset.pattern.permute.xlu0 0
    %1003 = vperm.xlu0 %1002, %v977
    %v1004 = vpop.permute.xlu0 %1003
    %1007 = vset.pattern.permute.xlu0 0
    %1008 = vperm.xlu0 %1007, %v978
    %v1009 = vpop.permute.xlu0 %1008
    %1012 = vset.pattern.permute.xlu0 0
    %1013 = vperm.xlu0 %1012, %v979
    %v1014 = vpop.permute.xlu0 %1013
    %1017 = vset.pattern.permute.xlu0 0
    %1018 = vperm.xlu0 %1017, %v980
    %v1019 = vpop.permute.xlu0 %1018
    %1022 = vset.pattern.permute.xlu0 0
    %1023 = vperm.xlu0 %1022, %v981
    %v1024 = vpop.permute.xlu0 %1023
    %1027 = vset.pattern.permute.xlu0 0
    %1028 = vperm.xlu0 %1027, %v982
    %v1029 = vpop.permute.xlu0 %1028
    %1032 = vset.pattern.permute.xlu0 0
    %1033 = vperm.xlu0 %1032, %v983
    %v1034 = vpop.permute.xlu0 %1033
    %1037 = vset.pattern.permute.xlu0 0
    %1038 = vperm.xlu0 %1037, %v984
    %v1039 = vpop.permute.xlu0 %1038
    %1042 = vset.pattern.permute.xlu0 0
    %1043 = vperm.xlu0 %1042, %v985
    %v1044 = vpop.permute.xlu0 %1043
    %1047 = vset.pattern.permute.xlu0 0
    %1048 = vperm.xlu0 %1047, %v986
    %v1049 = vpop.permute.xlu0 %1048
    %1052 = vset.pattern.permute.xlu0 0
    %1053 = vperm.xlu0 %1052, %v987
    %v1054 = vpop.permute.xlu0 %1053
    %1057 = vset.pattern.permute.xlu0 0
    %1058 = vperm.xlu0 %1057, %v988
    %v1059 = vpop.permute.xlu0 %1058
    %1062 = vset.pattern.permute.xlu0 0
    %1063 = vperm.xlu0 %1062, %v989
    %v1064 = vpop.permute.xlu0 %1063
    %1067 = vset.pattern.permute.xlu0 0
    %1068 = vperm.xlu0 %1067, %v990
    %v1069 = vpop.permute.xlu0 %1068
    %v1071 = vsub.f32 %v875, %v994
    %v1072 = vsub.f32 %v876, %v999
    %v1073 = vsub.f32 %v877, %v1004
    %v1074 = vsub.f32 %v878, %v1009
    %v1075 = vsub.f32 %v879, %v1014
    %v1076 = vsub.f32 %v880, %v1019
    %v1077 = vsub.f32 %v881, %v1024
    %v1078 = vsub.f32 %v882, %v1029
    %v1079 = vsub.f32 %v883, %v1034
    %v1080 = vsub.f32 %v884, %v1039
    %v1081 = vsub.f32 %v885, %v1044
    %v1082 = vsub.f32 %v886, %v1049
    %v1083 = vsub.f32 %v887, %v1054
    %v1084 = vsub.f32 %v888, %v1059
    %v1085 = vsub.f32 %v889, %v1064
    %v1086 = vsub.f32 %v890, %v1069
    %v1087 = vmul.f32 %v1071, 1.442695
    %v1088 = vpow.pop %v1087
    %v1089 = vmul.f32 %v1072, 1.442695
    %v1090 = vpow.pop %v1089
    %v1091 = vmul.f32 %v1073, 1.442695
    %v1092 = vpow.pop %v1091
    %v1093 = vmul.f32 %v1074, 1.442695
    %v1094 = vpow.pop %v1093
    %v1095 = vmul.f32 %v1075, 1.442695
    %v1096 = vpow.pop %v1095
    %v1097 = vmul.f32 %v1076, 1.442695
    %v1098 = vpow.pop %v1097
    %v1099 = vmul.f32 %v1077, 1.442695
    %v1100 = vpow.pop %v1099
    %v1101 = vmul.f32 %v1078, 1.442695
    %v1102 = vpow.pop %v1101
    %v1103 = vmul.f32 %v1079, 1.442695
    %v1104 = vpow.pop %v1103
    %v1105 = vmul.f32 %v1080, 1.442695
    %v1106 = vpow.pop %v1105
    %v1107 = vmul.f32 %v1081, 1.442695
    %v1108 = vpow.pop %v1107
    %v1109 = vmul.f32 %v1082, 1.442695
    %v1110 = vpow.pop %v1109
    %v1111 = vmul.f32 %v1083, 1.442695
    %v1112 = vpow.pop %v1111
    %v1113 = vmul.f32 %v1084, 1.442695
    %v1114 = vpow.pop %v1113
    %v1115 = vmul.f32 %v1085, 1.442695
    %v1116 = vpow.pop %v1115
    %v1117 = vmul.f32 %v1086, 1.442695
    %v1118 = vpow.pop %v1117
    %v1119 = vld [vmem:[#allocation3] sm:$0xff]
    %v1120 = vld [vmem:[#allocation3 + $0x8] sm:$0xff]
    %v1121 = vld [vmem:[#allocation3 + $0x10] sm:$0xff]
    %v1122 = vld [vmem:[#allocation3 + $0x18] sm:$0xff]
    %v1123 = vld [vmem:[#allocation3 + $0x20] sm:$0xff]
    %v1124 = vld [vmem:[#allocation3 + $0x28] sm:$0xff]
    %v1125 = vld [vmem:[#allocation3 + $0x30] sm:$0xff]
    %v1126 = vld [vmem:[#allocation3 + $0x38] sm:$0xff]
    %v1127 = vld [vmem:[#allocation3 + $0x40] sm:$0xff]
    %v1128 = vld [vmem:[#allocation3 + $0x48] sm:$0xff]
    %v1129 = vld [vmem:[#allocation3 + $0x50] sm:$0xff]
    %v1130 = vld [vmem:[#allocation3 + $0x58] sm:$0xff]
    %v1131 = vld [vmem:[#allocation3 + $0x60] sm:$0xff]
    %v1132 = vld [vmem:[#allocation3 + $0x68] sm:$0xff]
    %v1133 = vld [vmem:[#allocation3 + $0x70] sm:$0xff]
    %v1134 = vld [vmem:[#allocation3 + $0x78] sm:$0xff]
    %v1135 = vsub.f32 %v959, %v975
    %v1136 = vsub.f32 %v960, %v976
    %v1137 = vsub.f32 %v961, %v977
    %v1138 = vsub.f32 %v962, %v978
    %v1139 = vsub.f32 %v963, %v979
    %v1140 = vsub.f32 %v964, %v980
    %v1141 = vsub.f32 %v965, %v981
    %v1142 = vsub.f32 %v966, %v982
    %v1143 = vsub.f32 %v967, %v983
    %v1144 = vsub.f32 %v968, %v984
    %v1145 = vsub.f32 %v969, %v985
    %v1146 = vsub.f32 %v970, %v986
    %v1147 = vsub.f32 %v971, %v987
    %v1148 = vsub.f32 %v972, %v988
    %v1149 = vsub.f32 %v973, %v989
    %v1150 = vsub.f32 %v974, %v990
    %v1151 = vmul.f32 %v1135, 1.442695
    %v1152 = vpow.pop %v1151
    %v1153 = vmul.f32 %v1136, 1.442695
    %v1154 = vpow.pop %v1153
    %v1155 = vmul.f32 %v1137, 1.442695
    %v1156 = vpow.pop %v1155
    %v1157 = vmul.f32 %v1138, 1.442695
    %v1158 = vpow.pop %v1157
    %v1159 = vmul.f32 %v1139, 1.442695
    %v1160 = vpow.pop %v1159
    %v1161 = vmul.f32 %v1140, 1.442695
    %v1162 = vpow.pop %v1161
    %v1163 = vmul.f32 %v1141, 1.442695
    %v1164 = vpow.pop %v1163
    %v1165 = vmul.f32 %v1142, 1.442695
    %v1166 = vpow.pop %v1165
    %v1167 = vmul.f32 %v1143, 1.442695
    %v1168 = vpow.pop %v1167
    %v1169 = vmul.f32 %v1144, 1.442695
    %v1170 = vpow.pop %v1169
    %v1171 = vmul.f32 %v1145, 1.442695
    %v1172 = vpow.pop %v1171
    %v1173 = vmul.f32 %v1146, 1.442695
    %v1174 = vpow.pop %v1173
    %v1175 = vmul.f32 %v1147, 1.442695
    %v1176 = vpow.pop %v1175
    %v1177 = vmul.f32 %v1148, 1.442695
    %v1178 = vpow.pop %v1177
    %v1179 = vmul.f32 %v1149, 1.442695
    %v1180 = vpow.pop %v1179
    %v1181 = vmul.f32 %v1150, 1.442695
    %v1182 = vpow.pop %v1181
    %v1183 = vmul.f32 %v1119, %v1152
    %v1184 = vmul.f32 %v1120, %v1154
    %v1185 = vmul.f32 %v1121, %v1156
    %v1186 = vmul.f32 %v1122, %v1158
    %v1187 = vmul.f32 %v1123, %v1160
    %v1188 = vmul.f32 %v1124, %v1162
    %v1189 = vmul.f32 %v1125, %v1164
    %v1190 = vmul.f32 %v1126, %v1166
    %v1191 = vmul.f32 %v1127, %v1168
    %v1192 = vmul.f32 %v1128, %v1170
    %v1193 = vmul.f32 %v1129, %v1172
    %v1194 = vmul.f32 %v1130, %v1174
    %v1195 = vmul.f32 %v1131, %v1176
    %v1196 = vmul.f32 %v1132, %v1178
    %v1197 = vmul.f32 %v1133, %v1180
    %v1198 = vmul.f32 %v1134, %v1182
    %1199 = vadd.xlane.f32.xlu0 %v1088
    %v1200 = vpop.xlane.xlu0 %1199
    %1201 = vadd.xlane.f32.xlu0 %v1090
    %v1202 = vpop.xlane.xlu0 %1201
    %1203 = vadd.xlane.f32.xlu0 %v1092
    %v1204 = vpop.xlane.xlu0 %1203
    %1205 = vadd.xlane.f32.xlu0 %v1094
    %v1206 = vpop.xlane.xlu0 %1205
    %1207 = vadd.xlane.f32.xlu0 %v1096
    %v1208 = vpop.xlane.xlu0 %1207
    %1209 = vadd.xlane.f32.xlu0 %v1098
    %v1210 = vpop.xlane.xlu0 %1209
    %1211 = vadd.xlane.f32.xlu0 %v1100
    %v1212 = vpop.xlane.xlu0 %1211
    %1213 = vadd.xlane.f32.xlu0 %v1102
    %v1214 = vpop.xlane.xlu0 %1213
    %1215 = vadd.xlane.f32.xlu0 %v1104
    %v1216 = vpop.xlane.xlu0 %1215
    %1217 = vadd.xlane.f32.xlu0 %v1106
    %v1218 = vpop.xlane.xlu0 %1217
    %1219 = vadd.xlane.f32.xlu0 %v1108
    %v1220 = vpop.xlane.xlu0 %1219
    %1221 = vadd.xlane.f32.xlu0 %v1110
    %v1222 = vpop.xlane.xlu0 %1221
    %1223 = vadd.xlane.f32.xlu0 %v1112
    %v1224 = vpop.xlane.xlu0 %1223
    %1225 = vadd.xlane.f32.xlu0 %v1114
    %v1226 = vpop.xlane.xlu0 %1225
    %1227 = vadd.xlane.f32.xlu0 %v1116
    %v1228 = vpop.xlane.xlu0 %1227
    %1229 = vadd.xlane.f32.xlu0 %v1118
    %v1230 = vpop.xlane.xlu0 %1229
    %v1231 = vadd.f32 %v1183, %v1200
    %v1232 = vadd.f32 %v1184, %v1202
    %v1233 = vadd.f32 %v1185, %v1204
    %v1234 = vadd.f32 %v1186, %v1206
    %v1235 = vadd.f32 %v1187, %v1208
    %v1236 = vadd.f32 %v1188, %v1210
    %v1237 = vadd.f32 %v1189, %v1212
    %v1238 = vadd.f32 %v1190, %v1214
    %v1239 = vadd.f32 %v1191, %v1216
    %v1240 = vadd.f32 %v1192, %v1218
    %v1241 = vadd.f32 %v1193, %v1220
    %v1242 = vadd.f32 %v1194, %v1222
    %v1243 = vadd.f32 %v1195, %v1224
    %v1244 = vadd.f32 %v1196, %v1226
    %v1245 = vadd.f32 %v1197, %v1228
    %v1246 = vadd.f32 %v1198, %v1230
    %vm1247 = vcmask 7168
    %1248 = vst.msk [vmem:[#allocation3] sm:$0xff] %vm1247, %v1231
    %1249 = vst.msk [vmem:[#allocation3 + $0x8] sm:$0xff] %vm1247, %v1232
    %1250 = vst.msk [vmem:[#allocation3 + $0x10] sm:$0xff] %vm1247, %v1233
    %1251 = vst.msk [vmem:[#allocation3 + $0x18] sm:$0xff] %vm1247, %v1234
    %1252 = vst.msk [vmem:[#allocation3 + $0x20] sm:$0xff] %vm1247, %v1235
    %1253 = vst.msk [vmem:[#allocation3 + $0x28] sm:$0xff] %vm1247, %v1236
    %1254 = vst.msk [vmem:[#allocation3 + $0x30] sm:$0xff] %vm1247, %v1237
    %1255 = vst.msk [vmem:[#allocation3 + $0x38] sm:$0xff] %vm1247, %v1238
    %1256 = vst.msk [vmem:[#allocation3 + $0x40] sm:$0xff] %vm1247, %v1239
    %1257 = vst.msk [vmem:[#allocation3 + $0x48] sm:$0xff] %vm1247, %v1240
    %1258 = vst.msk [vmem:[#allocation3 + $0x50] sm:$0xff] %vm1247, %v1241
    %1259 = vst.msk [vmem:[#allocation3 + $0x58] sm:$0xff] %vm1247, %v1242
    %1260 = vst.msk [vmem:[#allocation3 + $0x60] sm:$0xff] %vm1247, %v1243
    %1261 = vst.msk [vmem:[#allocation3 + $0x68] sm:$0xff] %vm1247, %v1244
    %1262 = vst.msk [vmem:[#allocation3 + $0x70] sm:$0xff] %vm1247, %v1245
    %1263 = vst.msk [vmem:[#allocation3 + $0x78] sm:$0xff] %vm1247, %v1246
    %1264 = vst.msk [vmem:[#allocation2] sm:$0xff] %vm1247, %v975
    %1265 = vst.msk [vmem:[#allocation2 + $0x8] sm:$0xff] %vm1247, %v976
    %1266 = vst.msk [vmem:[#allocation2 + $0x10] sm:$0xff] %vm1247, %v977
    %1267 = vst.msk [vmem:[#allocation2 + $0x18] sm:$0xff] %vm1247, %v978
    %1268 = vst.msk [vmem:[#allocation2 + $0x20] sm:$0xff] %vm1247, %v979
    %1269 = vst.msk [vmem:[#allocation2 + $0x28] sm:$0xff] %vm1247, %v980
    %1270 = vst.msk [vmem:[#allocation2 + $0x30] sm:$0xff] %vm1247, %v981
    %1271 = vst.msk [vmem:[#allocation2 + $0x38] sm:$0xff] %vm1247, %v982
    %1272 = vst.msk [vmem:[#allocation2 + $0x40] sm:$0xff] %vm1247, %v983
    %1273 = vst.msk [vmem:[#allocation2 + $0x48] sm:$0xff] %vm1247, %v984
    %1274 = vst.msk [vmem:[#allocation2 + $0x50] sm:$0xff] %vm1247, %v985
    %1275 = vst.msk [vmem:[#allocation2 + $0x58] sm:$0xff] %vm1247, %v986
    %1276 = vst.msk [vmem:[#allocation2 + $0x60] sm:$0xff] %vm1247, %v987
    %1277 = vst.msk [vmem:[#allocation2 + $0x68] sm:$0xff] %vm1247, %v988
    %1278 = vst.msk [vmem:[#allocation2 + $0x70] sm:$0xff] %vm1247, %v989
    %1279 = vst.msk [vmem:[#allocation2 + $0x78] sm:$0xff] %vm1247, %v990
    // Predicated region
    $region22: #{tpu_custom_call.1} parent=1 // pred_check
      %p1280 = pneg %p15
    $region23: #{tpu_custom_call.1} parent=1 // pred_check_branch
      %1282 = sbr.rel (%p1280) target = $region25
    $region24: #{tpu_custom_call.1} parent=1 // pred_region
      %1283 = vst [vmem:[#allocation4] sm:$0x1] -1e+30
      %1284 = vst [vmem:[#allocation5] sm:$0x1] 0.0
    $region25: #{tpu_custom_call.1} parent=1 // pred_fallthru
      _
    %v1285 = vsel %vm856, 1, 0
    %v1286 = vsel %vm857, 1, 0
    %v1287 = vsel %vm858, 1, 0
    %v1288 = vsel %vm859, 1, 0
    %v1289 = vsel %vm860, 1, 0
    %v1290 = vsel %vm861, 1, 0
    %v1291 = vsel %vm862, 1, 0
    %v1292 = vsel %vm863, 1, 0
    %v1293 = vsel %vm864, 1, 0
    %v1294 = vsel %vm865, 1, 0
    %v1295 = vsel %vm866, 1, 0
    %v1296 = vsel %vm867, 1, 0
    %v1297 = vsel %vm868, 1, 0
    %v1298 = vsel %vm869, 1, 0
    %v1299 = vsel %vm870, 1, 0
    %v1300 = vsel %vm871, 1, 0
    %vm1301 = vcmp.eq.s32.totalorder %v1285, 1
    %vm1302 = vcmp.eq.s32.totalorder %v1286, 1
    %vm1303 = vcmp.eq.s32.totalorder %v1287, 1
    %vm1304 = vcmp.eq.s32.totalorder %v1288, 1
    %vm1305 = vcmp.eq.s32.totalorder %v1289, 1
    %vm1306 = vcmp.eq.s32.totalorder %v1290, 1
    %vm1307 = vcmp.eq.s32.totalorder %v1291, 1
    %vm1308 = vcmp.eq.s32.totalorder %v1292, 1
    %vm1309 = vcmp.eq.s32.totalorder %v1293, 1
    %vm1310 = vcmp.eq.s32.totalorder %v1294, 1
    %vm1311 = vcmp.eq.s32.totalorder %v1295, 1
    %vm1312 = vcmp.eq.s32.totalorder %v1296, 1
    %vm1313 = vcmp.eq.s32.totalorder %v1297, 1
    %vm1314 = vcmp.eq.s32.totalorder %v1298, 1
    %vm1315 = vcmp.eq.s32.totalorder %v1299, 1
    %vm1316 = vcmp.eq.s32.totalorder %v1300, 1
    %v1317 = vsel %vm1301, %v777, -1e+30
    %v1318 = vsel %vm1302, %v779, -1e+30
    %v1319 = vsel %vm1303, %v782, -1e+30
    %v1320 = vsel %vm1304, %v784, -1e+30
    %v1321 = vsel %vm1305, %v787, -1e+30
    %v1322 = vsel %vm1306, %v789, -1e+30
    %v1323 = vsel %vm1307, %v792, -1e+30
    %v1324 = vsel %vm1308, %v794, -1e+30
    %v1325 = vsel %vm1309, %v797, -1e+30
    %v1326 = vsel %vm1310, %v799, -1e+30
    %v1327 = vsel %vm1311, %v802, -1e+30
    %v1328 = vsel %vm1312, %v804, -1e+30
    %v1329 = vsel %vm1313, %v807, -1e+30
    %v1330 = vsel %vm1314, %v809, -1e+30
    %v1331 = vsel %vm1315, %v812, -1e+30
    %v1332 = vsel %vm1316, %v814, -1e+30
    %v1333 = vmax.f32 %v1317, %v1321
    %v1334 = vmax.f32 %v1318, %v1322
    %v1335 = vmax.f32 %v1319, %v1323
    %v1336 = vmax.f32 %v1320, %v1324
    %v1337 = vmax.f32 %v1333, %v1325
    %v1338 = vmax.f32 %v1334, %v1326
    %v1339 = vmax.f32 %v1335, %v1327
    %v1340 = vmax.f32 %v1336, %v1328
    %v1341 = vmax.f32 %v1337, %v1329
    %v1342 = vmax.f32 %v1338, %v1330
    %v1343 = vmax.f32 %v1339, %v1331
    %v1344 = vmax.f32 %v1340, %v1332
    %v1345 = vmax.f32 %v1341, %v1342
    %v1346 = vmax.f32 %v1343, %v1344
    %v1347 = vmax.f32 %v1345, %v1346
    %v1348 = vrot.slane %v1347, 4
    %v1349 = vmax.f32 %v1347, %v1348
    %v1350 = vrot.slane %v1349, 2
    %v1351 = vmax.f32 %v1349, %v1350
    %v1352 = vrot.slane %v1351, 1
    %v1353 = vmax.f32 %v1351, %v1352
    %v1354 = vld [vmem:[#allocation4] sm:$0x1]
    %v1355 = vmax.f32 %v1354, %v1353
    %v1356 = vmul.f32 %v975, 1.442695
    %v1357 = vpow.pop %v1356
    %v1358 = vmul.f32 %v976, 1.442695
    %v1359 = vpow.pop %v1358
    %v1360 = vmul.f32 %v977, 1.442695
    %v1361 = vpow.pop %v1360
    %v1362 = vmul.f32 %v978, 1.442695
    %v1363 = vpow.pop %v1362
    %v1364 = vmul.f32 %v979, 1.442695
    %v1365 = vpow.pop %v1364
    %v1366 = vmul.f32 %v980, 1.442695
    %v1367 = vpow.pop %v1366
    %v1368 = vmul.f32 %v981, 1.442695
    %v1369 = vpow.pop %v1368
    %v1370 = vmul.f32 %v982, 1.442695
    %v1371 = vpow.pop %v1370
    %v1372 = vmul.f32 %v983, 1.442695
    %v1373 = vpow.pop %v1372
    %v1374 = vmul.f32 %v984, 1.442695
    %v1375 = vpow.pop %v1374
    %v1376 = vmul.f32 %v985, 1.442695
    %v1377 = vpow.pop %v1376
    %v1378 = vmul.f32 %v986, 1.442695
    %v1379 = vpow.pop %v1378
    %v1380 = vmul.f32 %v987, 1.442695
    %v1381 = vpow.pop %v1380
    %v1382 = vmul.f32 %v988, 1.442695
    %v1383 = vpow.pop %v1382
    %v1384 = vmul.f32 %v989, 1.442695
    %v1385 = vpow.pop %v1384
    %v1386 = vmul.f32 %v990, 1.442695
    %v1387 = vpow.pop %v1386
    %1389 = vset.pattern.permute.xlu0 0
    %1390 = vperm.xlu0 %1389, %v1357
    %v1391 = vpop.permute.xlu0 %1390
    %1394 = vset.pattern.permute.xlu0 0
    %1395 = vperm.xlu0 %1394, %v1359
    %v1396 = vpop.permute.xlu0 %1395
    %1399 = vset.pattern.permute.xlu0 0
    %1400 = vperm.xlu0 %1399, %v1361
    %v1401 = vpop.permute.xlu0 %1400
    %1404 = vset.pattern.permute.xlu0 0
    %1405 = vperm.xlu0 %1404, %v1363
    %v1406 = vpop.permute.xlu0 %1405
    %1409 = vset.pattern.permute.xlu0 0
    %1410 = vperm.xlu0 %1409, %v1365
    %v1411 = vpop.permute.xlu0 %1410
    %1414 = vset.pattern.permute.xlu0 0
    %1415 = vperm.xlu0 %1414, %v1367
    %v1416 = vpop.permute.xlu0 %1415
    %1419 = vset.pattern.permute.xlu0 0
    %1420 = vperm.xlu0 %1419, %v1369
    %v1421 = vpop.permute.xlu0 %1420
    %1424 = vset.pattern.permute.xlu0 0
    %1425 = vperm.xlu0 %1424, %v1371
    %v1426 = vpop.permute.xlu0 %1425
    %1429 = vset.pattern.permute.xlu0 0
    %1430 = vperm.xlu0 %1429, %v1373
    %v1431 = vpop.permute.xlu0 %1430
    %1434 = vset.pattern.permute.xlu0 0
    %1435 = vperm.xlu0 %1434, %v1375
    %v1436 = vpop.permute.xlu0 %1435
    %1439 = vset.pattern.permute.xlu0 0
    %1440 = vperm.xlu0 %1439, %v1377
    %v1441 = vpop.permute.xlu0 %1440
    %1444 = vset.pattern.permute.xlu0 0
    %1445 = vperm.xlu0 %1444, %v1379
    %v1446 = vpop.permute.xlu0 %1445
    %1449 = vset.pattern.permute.xlu0 0
    %1450 = vperm.xlu0 %1449, %v1381
    %v1451 = vpop.permute.xlu0 %1450
    %1454 = vset.pattern.permute.xlu0 0
    %1455 = vperm.xlu0 %1454, %v1383
    %v1456 = vpop.permute.xlu0 %1455
    %1459 = vset.pattern.permute.xlu0 0
    %1460 = vperm.xlu0 %1459, %v1385
    %v1461 = vpop.permute.xlu0 %1460
    %1464 = vset.pattern.permute.xlu0 0
    %1465 = vperm.xlu0 %1464, %v1387
    %v1466 = vpop.permute.xlu0 %1465
    %v1468 = vmul.f32 %v1088, %v1391
    %v1469 = vmul.f32 %v1090, %v1396
    %v1470 = vmul.f32 %v1092, %v1401
    %v1471 = vmul.f32 %v1094, %v1406
    %v1472 = vmul.f32 %v1096, %v1411
    %v1473 = vmul.f32 %v1098, %v1416
    %v1474 = vmul.f32 %v1100, %v1421
    %v1475 = vmul.f32 %v1102, %v1426
    %v1476 = vmul.f32 %v1104, %v1431
    %v1477 = vmul.f32 %v1106, %v1436
    %v1478 = vmul.f32 %v1108, %v1441
    %v1479 = vmul.f32 %v1110, %v1446
    %v1480 = vmul.f32 %v1112, %v1451
    %v1481 = vmul.f32 %v1114, %v1456
    %v1482 = vmul.f32 %v1116, %v1461
    %v1483 = vmul.f32 %v1118, %v1466
    %v1484 = vsel %vm1301, %v1468, 0.0
    %v1485 = vsel %vm1302, %v1469, 0.0
    %v1486 = vsel %vm1303, %v1470, 0.0
    %v1487 = vsel %vm1304, %v1471, 0.0
    %v1488 = vsel %vm1305, %v1472, 0.0
    %v1489 = vsel %vm1306, %v1473, 0.0
    %v1490 = vsel %vm1307, %v1474, 0.0
    %v1491 = vsel %vm1308, %v1475, 0.0
    %v1492 = vsel %vm1309, %v1476, 0.0
    %v1493 = vsel %vm1310, %v1477, 0.0
    %v1494 = vsel %vm1311, %v1478, 0.0
    %v1495 = vsel %vm1312, %v1479, 0.0
    %v1496 = vsel %vm1313, %v1480, 0.0
    %v1497 = vsel %vm1314, %v1481, 0.0
    %v1498 = vsel %vm1315, %v1482, 0.0
    %v1499 = vsel %vm1316, %v1483, 0.0
    %v1500 = vadd.f32 %v1484, %v1485
    %v1501 = vadd.f32 %v1500, %v1486
    %v1502 = vadd.f32 %v1501, %v1487
    %v1503 = vadd.f32 %v1502, %v1488
    %v1504 = vadd.f32 %v1503, %v1489
    %v1505 = vadd.f32 %v1504, %v1490
    %v1506 = vadd.f32 %v1505, %v1491
    %v1507 = vadd.f32 %v1506, %v1492
    %v1508 = vadd.f32 %v1507, %v1493
    %v1509 = vadd.f32 %v1508, %v1494
    %v1510 = vadd.f32 %v1509, %v1495
    %v1511 = vadd.f32 %v1510, %v1496
    %v1512 = vadd.f32 %v1511, %v1497
    %v1513 = vadd.f32 %v1512, %v1498
    %v1514 = vadd.f32 %v1513, %v1499
    %v1515 = vrot.slane %v1514, 4
    %v1516 = vadd.f32 %v1514, %v1515
    %v1517 = vrot.slane %v1516, 2
    %v1518 = vadd.f32 %v1516, %v1517
    %v1519 = vrot.slane %v1518, 1
    %v1520 = vadd.f32 %v1518, %v1519
    %v1521 = vsub.f32 0.0, %v1355
    %v1522 = vmul.f32 %v1521, 1.442695
    %v1523 = vpow.pop %v1522
    %v1524 = vmul.f32 %v1520, %v1523
    %v1525 = vld [vmem:[#allocation5] sm:$0x1]
    %v1526 = vsub.f32 %v1354, %v1355
    %v1527 = vmul.f32 %v1526, 1.442695
    %v1528 = vpow.pop %v1527
    %v1529 = vmul.f32 %v1525, %v1528
    %v1530 = vadd.f32 %v1529, %v1524
    %1531 = vst [vmem:[#allocation5] sm:$0x1] %v1530
    %1532 = vst [vmem:[#allocation4] sm:$0x1] %v1355
    %p1533 = scmp.ge.s32.totalorder %s853, %s833
    %s1534 = sadd.s32 0, 1
    %s1535 = smul.u32 %s1534, 128
    %p1536 = scmp.lt.s32.totalorder %s853, %s1535
    %p1537 = pnand %p1533, %p1536
    %p1538 = pneg %p1537
    // Predicated region
    $region26: #{tpu_custom_call.1} parent=1 // pred_check
      _
    $region27: #{tpu_custom_call.1} parent=1 // pred_check_branch
      %1540 = sbr.rel (%p1537) target = $region29
    $region28: #{tpu_custom_call.1} parent=1 // pred_region
      %s1541 = ssub.s32 %s853, %s833
      %v1542 = vstv %s1541
      %v1543 = vadd.s32 %v852, %v1542
      %vm1544 = vcmp.eq.s32.totalorder %v817, %v1543
      %vm1545 = vcmp.eq.s32.totalorder %v818, %v1543
      %vm1546 = vcmp.eq.s32.totalorder %v819, %v1543
      %vm1547 = vcmp.eq.s32.totalorder %v820, %v1543
      %vm1548 = vcmp.eq.s32.totalorder %v821, %v1543
      %vm1549 = vcmp.eq.s32.totalorder %v822, %v1543
      %vm1550 = vcmp.eq.s32.totalorder %v823, %v1543
      %vm1551 = vcmp.eq.s32.totalorder %v824, %v1543
      %vm1552 = vcmp.eq.s32.totalorder %v825, %v1543
      %vm1553 = vcmp.eq.s32.totalorder %v826, %v1543
      %vm1554 = vcmp.eq.s32.totalorder %v827, %v1543
      %vm1555 = vcmp.eq.s32.totalorder %v828, %v1543
      %vm1556 = vcmp.eq.s32.totalorder %v829, %v1543
      %vm1557 = vcmp.eq.s32.totalorder %v830, %v1543
      %vm1558 = vcmp.eq.s32.totalorder %v831, %v1543
      %vm1559 = vcmp.eq.s32.totalorder %v832, %v1543
      %vm1560 = vmand %vm1544, %vm874
      %vm1561 = vmand %vm1545, %vm874
      %vm1562 = vmand %vm1546, %vm874
      %vm1563 = vmand %vm1547, %vm874
      %vm1564 = vmand %vm1548, %vm874
      %vm1565 = vmand %vm1549, %vm874
      %vm1566 = vmand %vm1550, %vm874
      %vm1567 = vmand %vm1551, %vm874
      %vm1568 = vmand %vm1552, %vm874
      %vm1569 = vmand %vm1553, %vm874
      %vm1570 = vmand %vm1554, %vm874
      %vm1571 = vmand %vm1555, %vm874
      %vm1572 = vmand %vm1556, %vm874
      %vm1573 = vmand %vm1557, %vm874
      %vm1574 = vmand %vm1558, %vm874
      %vm1575 = vmand %vm1559, %vm874
      %v1576 = vsel %vm1560, %v777, 0.0
      %v1577 = vsel %vm1561, %v779, 0.0
      %v1578 = vsel %vm1562, %v782, 0.0
      %v1579 = vsel %vm1563, %v784, 0.0
      %v1580 = vsel %vm1564, %v787, 0.0
      %v1581 = vsel %vm1565, %v789, 0.0
      %v1582 = vsel %vm1566, %v792, 0.0
      %v1583 = vsel %vm1567, %v794, 0.0
      %v1584 = vsel %vm1568, %v797, 0.0
      %v1585 = vsel %vm1569, %v799, 0.0
      %v1586 = vsel %vm1570, %v802, 0.0
      %v1587 = vsel %vm1571, %v804, 0.0
      %v1588 = vsel %vm1572, %v807, 0.0
      %v1589 = vsel %vm1573, %v809, 0.0
      %v1590 = vsel %vm1574, %v812, 0.0
      %v1591 = vsel %vm1575, %v814, 0.0
      %v1592 = vadd.f32 %v1576, %v1577
      %v1593 = vadd.f32 %v1592, %v1578
      %v1594 = vadd.f32 %v1593, %v1579
      %v1595 = vadd.f32 %v1594, %v1580
      %v1596 = vadd.f32 %v1595, %v1581
      %v1597 = vadd.f32 %v1596, %v1582
      %v1598 = vadd.f32 %v1597, %v1583
      %v1599 = vadd.f32 %v1598, %v1584
      %v1600 = vadd.f32 %v1599, %v1585
      %v1601 = vadd.f32 %v1600, %v1586
      %v1602 = vadd.f32 %v1601, %v1587
      %v1603 = vadd.f32 %v1602, %v1588
      %v1604 = vadd.f32 %v1603, %v1589
      %v1605 = vadd.f32 %v1604, %v1590
      %v1606 = vadd.f32 %v1605, %v1591
      %1607 = vadd.xlane.f32.xlu0 %v1606
      %v1608 = vpop.xlane.xlu0 %1607
      %v1609 = vrot.slane %v1608, 4
      %v1610 = vadd.f32 %v1608, %v1609
      %v1611 = vrot.slane %v1610, 2
      %v1612 = vadd.f32 %v1610, %v1611
      %v1613 = vrot.slane %v1612, 1
      %v1614 = vadd.f32 %v1612, %v1613
      %s1615 = vtos %v1614
      %v1616 = vstv %s1615
      %v1617 = vld [vmem:[#allocation6] sm:$0x1]
      %v1618 = vmul.f32 %v1616, 2.0
      %v1619 = vsub.f32 %v1617, %v1618
      %vm1620 = vcmask 0
      %1621 = vst.msk [vmem:[#allocation6] sm:$0x1] %vm1620, %v1619
    $region29: #{tpu_custom_call.1} parent=1 // pred_fallthru
      _
    // Predicated region
    $region30: #{tpu_custom_call.1} parent=1 // pred_check
      %p1622 = pneg %p16
    $region31: #{tpu_custom_call.1} parent=1 // pred_check_branch
      %1624 = sbr.rel (%p1622) target = $region33
    $region32: #{tpu_custom_call.1} parent=1 // pred_region
      %v1625 = vld [vmem:[#allocation3] sm:$0xff]
      %v1626 = vld [vmem:[#allocation3 + $0x8] sm:$0xff]
      %v1627 = vld [vmem:[#allocation3 + $0x10] sm:$0xff]
      %v1628 = vld [vmem:[#allocation3 + $0x18] sm:$0xff]
      %v1629 = vld [vmem:[#allocation3 + $0x20] sm:$0xff]
      %v1630 = vld [vmem:[#allocation3 + $0x28] sm:$0xff]
      %v1631 = vld [vmem:[#allocation3 + $0x30] sm:$0xff]
      %v1632 = vld [vmem:[#allocation3 + $0x38] sm:$0xff]
      %v1633 = vld [vmem:[#allocation3 + $0x40] sm:$0xff]
      %v1634 = vld [vmem:[#allocation3 + $0x48] sm:$0xff]
      %v1635 = vld [vmem:[#allocation3 + $0x50] sm:$0xff]
      %v1636 = vld [vmem:[#allocation3 + $0x58] sm:$0xff]
      %v1637 = vld [vmem:[#allocation3 + $0x60] sm:$0xff]
      %v1638 = vld [vmem:[#allocation3 + $0x68] sm:$0xff]
      %v1639 = vld [vmem:[#allocation3 + $0x70] sm:$0xff]
      %v1640 = vld [vmem:[#allocation3 + $0x78] sm:$0xff]
      %v1641 = vlog2.pop %v1625
      %v1642 = vmul.f32 %v1641, 0.6931472
      %v1643 = vlog2.pop %v1626
      %v1644 = vmul.f32 %v1643, 0.6931472
      %v1645 = vlog2.pop %v1627
      %v1646 = vmul.f32 %v1645, 0.6931472
      %v1647 = vlog2.pop %v1628
      %v1648 = vmul.f32 %v1647, 0.6931472
      %v1649 = vlog2.pop %v1629
      %v1650 = vmul.f32 %v1649, 0.6931472
      %v1651 = vlog2.pop %v1630
      %v1652 = vmul.f32 %v1651, 0.6931472
      %v1653 = vlog2.pop %v1631
      %v1654 = vmul.f32 %v1653, 0.6931472
      %v1655 = vlog2.pop %v1632
      %v1656 = vmul.f32 %v1655, 0.6931472
      %v1657 = vlog2.pop %v1633
      %v1658 = vmul.f32 %v1657, 0.6931472
      %v1659 = vlog2.pop %v1634
      %v1660 = vmul.f32 %v1659, 0.6931472
      %v1661 = vlog2.pop %v1635
      %v1662 = vmul.f32 %v1661, 0.6931472
      %v1663 = vlog2.pop %v1636
      %v1664 = vmul.f32 %v1663, 0.6931472
      %v1665 = vlog2.pop %v1637
      %v1666 = vmul.f32 %v1665, 0.6931472
      %v1667 = vlog2.pop %v1638
      %v1668 = vmul.f32 %v1667, 0.6931472
      %v1669 = vlog2.pop %v1639
      %v1670 = vmul.f32 %v1669, 0.6931472
      %v1671 = vlog2.pop %v1640
      %v1672 = vmul.f32 %v1671, 0.6931472
      %v1673 = vld [vmem:[#allocation2] sm:$0xff]
      %v1674 = vld [vmem:[#allocation2 + $0x8] sm:$0xff]
      %v1675 = vld [vmem:[#allocation2 + $0x10] sm:$0xff]
      %v1676 = vld [vmem:[#allocation2 + $0x18] sm:$0xff]
      %v1677 = vld [vmem:[#allocation2 + $0x20] sm:$0xff]
      %v1678 = vld [vmem:[#allocation2 + $0x28] sm:$0xff]
      %v1679 = vld [vmem:[#allocation2 + $0x30] sm:$0xff]
      %v1680 = vld [vmem:[#allocation2 + $0x38] sm:$0xff]
      %v1681 = vld [vmem:[#allocation2 + $0x40] sm:$0xff]
      %v1682 = vld [vmem:[#allocation2 + $0x48] sm:$0xff]
      %v1683 = vld [vmem:[#allocation2 + $0x50] sm:$0xff]
      %v1684 = vld [vmem:[#allocation2 + $0x58] sm:$0xff]
      %v1685 = vld [vmem:[#allocation2 + $0x60] sm:$0xff]
      %v1686 = vld [vmem:[#allocation2 + $0x68] sm:$0xff]
      %v1687 = vld [vmem:[#allocation2 + $0x70] sm:$0xff]
      %v1688 = vld [vmem:[#allocation2 + $0x78] sm:$0xff]
      %v1689 = vadd.f32 %v1642, %v1673
      %v1690 = vadd.f32 %v1644, %v1674
      %v1691 = vadd.f32 %v1646, %v1675
      %v1692 = vadd.f32 %v1648, %v1676
      %v1693 = vadd.f32 %v1650, %v1677
      %v1694 = vadd.f32 %v1652, %v1678
      %v1695 = vadd.f32 %v1654, %v1679
      %v1696 = vadd.f32 %v1656, %v1680
      %v1697 = vadd.f32 %v1658, %v1681
      %v1698 = vadd.f32 %v1660, %v1682
      %v1699 = vadd.f32 %v1662, %v1683
      %v1700 = vadd.f32 %v1664, %v1684
      %v1701 = vadd.f32 %v1666, %v1685
      %v1702 = vadd.f32 %v1668, %v1686
      %v1703 = vadd.f32 %v1670, %v1687
      %v1704 = vadd.f32 %v1672, %v1688
      %v1705 = vsel %vm856, %v1689, 0.0
      %v1706 = vsel %vm857, %v1690, 0.0
      %v1707 = vsel %vm858, %v1691, 0.0
      %v1708 = vsel %vm859, %v1692, 0.0
      %v1709 = vsel %vm860, %v1693, 0.0
      %v1710 = vsel %vm861, %v1694, 0.0
      %v1711 = vsel %vm862, %v1695, 0.0
      %v1712 = vsel %vm863, %v1696, 0.0
      %v1713 = vsel %vm864, %v1697, 0.0
      %v1714 = vsel %vm865, %v1698, 0.0
      %v1715 = vsel %vm866, %v1699, 0.0
      %v1716 = vsel %vm867, %v1700, 0.0
      %v1717 = vsel %vm868, %v1701, 0.0
      %v1718 = vsel %vm869, %v1702, 0.0
      %v1719 = vsel %vm870, %v1703, 0.0
      %v1720 = vsel %vm871, %v1704, 0.0
      %v1721 = vld [vmem:[#allocation6] sm:$0x1]
      %v1722 = vsel %vm1247, %v1705, 0.0
      %v1723 = vsel %vm1247, %v1706, 0.0
      %v1724 = vadd.f32 %v1722, %v1723
      %v1725 = vsel %vm1247, %v1707, 0.0
      %v1726 = vadd.f32 %v1724, %v1725
      %v1727 = vsel %vm1247, %v1708, 0.0
      %v1728 = vadd.f32 %v1726, %v1727
      %v1729 = vsel %vm1247, %v1709, 0.0
      %v1730 = vadd.f32 %v1728, %v1729
      %v1731 = vsel %vm1247, %v1710, 0.0
      %v1732 = vadd.f32 %v1730, %v1731
      %v1733 = vsel %vm1247, %v1711, 0.0
      %v1734 = vadd.f32 %v1732, %v1733
      %v1735 = vsel %vm1247, %v1712, 0.0
      %v1736 = vadd.f32 %v1734, %v1735
      %v1737 = vsel %vm1247, %v1713, 0.0
      %v1738 = vadd.f32 %v1736, %v1737
      %v1739 = vsel %vm1247, %v1714, 0.0
      %v1740 = vadd.f32 %v1738, %v1739
      %v1741 = vsel %vm1247, %v1715, 0.0
      %v1742 = vadd.f32 %v1740, %v1741
      %v1743 = vsel %vm1247, %v1716, 0.0
      %v1744 = vadd.f32 %v1742, %v1743
      %v1745 = vsel %vm1247, %v1717, 0.0
      %v1746 = vadd.f32 %v1744, %v1745
      %v1747 = vsel %vm1247, %v1718, 0.0
      %v1748 = vadd.f32 %v1746, %v1747
      %v1749 = vsel %vm1247, %v1719, 0.0
      %v1750 = vadd.f32 %v1748, %v1749
      %v1751 = vsel %vm1247, %v1720, 0.0
      %v1752 = vadd.f32 %v1750, %v1751
      %1753 = vadd.xlane.f32.xlu0 %v1752
      %v1754 = vpop.xlane.xlu0 %1753
      %v1755 = vrot.slane %v1754, 4
      %v1756 = vadd.f32 %v1754, %v1755
      %v1757 = vrot.slane %v1756, 2
      %v1758 = vadd.f32 %v1756, %v1757
      %v1759 = vrot.slane %v1758, 1
      %v1760 = vadd.f32 %v1758, %v1759
      %s1761 = vtos %v1760
      %v1762 = vstv %s1761
      %v1763 = vadd.f32 %v1721, %v1762
      %vm1764 = vcmask 0
      %1765 = vst.msk [vmem:[#allocation6] sm:$0x1] %vm1764, %v1763
    $region33: #{tpu_custom_call.1} parent=1 // pred_fallthru
      _
    // Predicated region
    $region34: #{tpu_custom_call.1} parent=1 // pred_check
      _
    $region35: #{tpu_custom_call.1} parent=1 // pred_check_branch
      %1767 = sbr.rel (%p17) target = $region37
    $region36: #{tpu_custom_call.1} parent=1 // pred_region
      %v1768 = vld [vmem:[#allocation5] sm:$0x1]
      %v1769 = vlog2.pop %v1768
      %v1770 = vmul.f32 %v1769, 0.6931472
      %v1771 = vld [vmem:[#allocation4] sm:$0x1]
      %v1772 = vadd.f32 %v1770, %v1771
      %vm1773 = vcmp.lt.s32.totalorder %v852, 8
      %v1774 = vsel %vm1773, %v1772, 0.0
      %v1775 = vld [vmem:[#allocation6] sm:$0x1]
      %vm1776 = vcmask 1040384
      %v1777 = vsel %vm1776, %v1774, 0.0
      %1778 = vadd.xlane.f32.xlu0 %v1777
      %v1779 = vpop.xlane.xlu0 %1778
      %v1780 = vrot.slane %v1779, 4
      %v1781 = vadd.f32 %v1779, %v1780
      %v1782 = vrot.slane %v1781, 2
      %v1783 = vadd.f32 %v1781, %v1782
      %v1784 = vrot.slane %v1783, 1
      %v1785 = vadd.f32 %v1783, %v1784
      %s1786 = vtos %v1785
      %v1787 = vstv %s1786
      %v1788 = vadd.f32 %v1775, %v1787
      %v1789 = vmul.f32 %v1788, 0.0625
      %vm1790 = vcmask 0
      %1791 = vst.msk [vmem:[#allocation10] sm:$0x1] %vm1790, %v1789
    $region37: #{tpu_custom_call.1} parent=1 // pred_fallthru
      _
    // Predicated region
    $region38: #{tpu_custom_call.1} parent=1 // pred_check
      _
    $region39: #{tpu_custom_call.1} parent=1 // pred_check_branch
      %1793 = sbr.rel (0) target = $region41
    $region40: #{tpu_custom_call.1} parent=1 // pred_region
      %1795 = vsyncadd [#allocation11], 0
      %s1797 = sshll.u32 [#allocation10], 4
      %s1798 = int_to_ptr.vmem [resolvable:$true] %s1797
      %s1799 = sshll.u32 %s3, 4
      %s1800 = int_to_ptr.hbm [resolvable:$true] %s1799
      %1802 = dma.vmem_to_hbm [thread:$0]  %s1798, 16, %s1800, [#allocation11]
    $region41: #{tpu_custom_call.1} parent=1 // pred_fallthru
      _
    // Predicated region
    $region42: #{tpu_custom_call.1} parent=1 // pred_check
      _
    $region43: #{tpu_custom_call.1} parent=1 // pred_check_branch
      %1804 = sbr.rel (0) target = $region45
    $region44: #{tpu_custom_call.1} parent=1 // pred_region
      %1806 = dma.done [#allocation11], 16
    $region45: #{tpu_custom_call.1} parent=1 // pred_fallthru
      _
    %1807 = vsyncpa [#allocation11], 1

</llo_original>
